<compile_context>
chip_gen: v7x
topology: tpu7x:2x2x1
jax: 0.10.0
libtpu: 0.0.40
codegen_flags: <defaults>
</compile_context>

<pallas_src>
import functools
import math
import jax
import jax.numpy as jnp
from jax import lax
from jax.experimental import pallas as pl
from jax.experimental.pallas import tpu as pltpu


# ----------------------------- host-side B-spline helpers (fixed positions) ------------
def b_batch(x, grid, k):
    """x: (n, in_dim), grid: (in_dim, n_grid). Returns (n, in_dim, n_grid - k - 1)."""
    xg = x[:, :, None]
    g = grid[None, :, :]
    if k == 0:
        value = ((xg >= g[:, :, :-1]) & (xg < g[:, :, 1:])).astype(x.dtype)
    else:
        b_km1 = b_batch(x, grid, k - 1)
        value = (xg - g[:, :, : -(k + 1)]) / (g[:, :, k:-1] - g[:, :, : -(k + 1)]) * b_km1[:, :, :-1] \
              + (g[:, :, k + 1:] - xg) / (g[:, :, k + 1:] - g[:, :, 1:-k]) * b_km1[:, :, 1:]
    return jnp.nan_to_num(value)


def extend_grid(grid, k_extend):
    h = (grid[:, -1:] - grid[:, :1]) / (grid.shape[1] - 1)
    for _ in range(k_extend):
        grid = jnp.concatenate([grid[:, :1] - h, grid], axis=1)
        grid = jnp.concatenate([grid, grid[:, -1:] + h], axis=1)
    return grid


# ----------------------------- Pallas kernel -------------------------------------------
def seq_encoder_kernel(x_idx_ref, emb_ref, pos_bias_ref, attn_w_ref, out_ref,
                       slab_ref, *, seq_unroll):
    # x_idx_ref    : SMEM (B_pad*S,) int32  -- flattened scalar-prefetched event indices
    # emb_ref      : VMEM (V, 1, E)         -- embedding table (dynamic major-axis gather)
    # pos_bias_ref : VMEM (S, 1, E)         -- pe + KAN positional bias (hoisted)
    # attn_w_ref   : VMEM (1, E)            -- attention projection (lane-major)
    # out_ref      : VMEM (btile, P)        -- P = 3E rounded up to a multiple of 128
    # slab_ref     : VMEM (btile, E)        -- per-position gather staging slab
    btile, E = slab_ref.shape
    S = pos_bias_ref.shape[0]
    base = pl.program_id(0) * (btile * S)

    w = attn_w_ref[...]                                       # (1, E)

    def step(s, carry):
        m, l, acc, ssum, smax = carry

        # Interleaved row gathers for all btile batch elements at position s
        # (independent; static unroll lets the scheduler fill the ld/st slots).
        for bi in range(btile):
            idx = x_idx_ref[base + bi * S + s]
            slab_ref[pl.ds(bi, 1), :] = emb_ref[idx]           # (1, E) table row
        slab = slab_ref[...] + pos_bias_ref[s]                 # (btile, E) + (1, E)

        # Fused online pooling: flash-style softmax accumulation + running sum/max.
        logit = jnp.sum(slab * w, axis=-1, keepdims=True)      # (btile, 1)  VPU + lane reduce
        m_new = jnp.maximum(m, logit)
        alpha = jnp.exp(m - m_new)
        p = jnp.exp(logit - m_new)
        l = alpha * l + p
        acc = alpha * acc + p * slab
        ssum = ssum + slab
        smax = jnp.maximum(smax, slab)
        return (m_new, l, acc, ssum, smax)

    init = (jnp.full((btile, 1), -jnp.inf, jnp.float32),       # running max logit
            jnp.zeros((btile, 1), jnp.float32),                # running softmax denom
            jnp.zeros((btile, E), jnp.float32),                # attended accumulator
            jnp.zeros((btile, E), jnp.float32),                # sum (for mean)
            jnp.full((btile, E), -jnp.inf, jnp.float32))       # running max features
    _, l, acc, ssum, smax = lax.fori_loop(0, S, step, init, unroll=seq_unroll)

    attended = acc * pl.reciprocal(l)                          # exact; denom is only (btile, 1)
    mean_f = ssum * (1.0 / S)

    feats = [attended, mean_f, smax]
    pad = out_ref.shape[1] - 3 * E
    if pad > 0:
        feats.append(jnp.zeros((btile, pad), jnp.float32))
    out_ref[...] = jnp.concatenate(feats, axis=-1)             # single lane-dense store


def _round_up(x, m):
    return -(-x // m) * m


def sequence_encoder(x_idx, emb_table, pe, positions, basis, coef_mat,
                     scale_base, scale_sp, mask, attn_w, *, btile=None):
    B, S = x_idx.shape
    V, E = emb_table.shape

    # Batch-invariant positional bias: pe + KANLayer(positions). Hoisted out of the kernel.
    silu_p = positions * jax.nn.sigmoid(positions)                        # (S, 1)
    kan = mask * (scale_base * silu_p + scale_sp * (basis @ coef_mat))    # (S, E)
    pos_bias = (pe + kan).astype(jnp.float32).reshape(S, 1, E)

    # Table reshaped so the gather index hits a major (untiled) axis.
    # TODO(synk): for large vocabularies keep the table in HBM (memory_space=pl.ANY) and
    # DMA-gather rows into a multi-buffered VMEM staging tile instead of a resident table.
    emb3 = emb_table.astype(jnp.float32).reshape(V, 1, E)
    attn_row = attn_w.astype(jnp.float32).reshape(1, E)

    # Batch tile: multiple of 8 (f32 sublane tile) so scratch/output stores are unmasked;
    # keep it fat (single-TC v5e/v6e want few grid steps; per-step overhead ~0.35us).
    if btile is None:
        btile = min(_round_up(B, 8), 128)
    btile = max(8, _round_up(btile, 8))
    n_steps = -(-B // btile)
    B_pad = n_steps * btile

    # Clamp indices (nn.Embedding errors on OOB; a Pallas gather would silently read
    # garbage), pad the batch, and flatten to a 1-D SMEM prefetch array (a 2-D SMEM
    # array pads to [ceil(B/8)*8, ceil(S/128)*128] words — huge waste at small S).
    x_flat = jnp.clip(x_idx.astype(jnp.int32), 0, V - 1)
    if B_pad != B:
        x_flat = jnp.pad(x_flat, ((0, B_pad - B), (0, 0)))
    x_flat = x_flat.reshape(B_pad * S)

    P = _round_up(3 * E, 128)                                   # lane-dense output width

    # Explicit VMEM budget: single-buffered constants + double-buffered output + slab.
    tile_pad = lambda r, c: _round_up(max(r, 1), 8) * _round_up(max(c, 1), 128) * 4
    vmem_est = (V * tile_pad(1, E) + S * tile_pad(1, E) + tile_pad(1, E)
                + 2 * tile_pad(btile, P) + tile_pad(btile, E))
    vmem_limit = int(min(64 << 20, max(16 << 20, 4 * vmem_est)))

    const = pl.Buffered(1)    # block index never changes across the grid: one buffer only
    kernel = functools.partial(seq_encoder_kernel, seq_unroll=min(S, 8))

    out = pl.pallas_call(
        kernel,
        out_shape=jax.ShapeDtypeStruct((B_pad, P), jnp.float32),
        grid_spec=pltpu.PrefetchScalarGridSpec(
            num_scalar_prefetch=1,                              # x_flat -> SMEM
            grid=(n_steps,),
            in_specs=[
                pl.BlockSpec((V, 1, E), lambda b, idx: (0, 0, 0), pipeline_mode=const),
                pl.BlockSpec((S, 1, E), lambda b, idx: (0, 0, 0), pipeline_mode=const),
                pl.BlockSpec((1, E), lambda b, idx: (0, 0), pipeline_mode=const),
            ],
            out_specs=pl.BlockSpec((btile, P), lambda b, idx: (b, 0)),
            scratch_shapes=[pltpu.VMEM((btile, E), jnp.float32)],
        ),
        compiler_params=pltpu.CompilerParams(
            dimension_semantics=("parallel",),
            vmem_limit_bytes=vmem_limit,
        ),
    )(x_flat, emb3, pos_bias, attn_row)
    return out[:B, : 3 * E]


# ----------------------------- reference (pure JAX) ------------------------------------
def reference(x_idx, emb_table, pe, positions, basis, coef_mat,
              scale_base, scale_sp, mask, attn_w):
    emb = emb_table[x_idx] + pe[None]                                   # (B, S, E)
    silu_p = positions * jax.nn.sigmoid(positions)                      # (S, 1)
    kan = mask * (scale_base * silu_p + scale_sp * (basis @ coef_mat))  # (S, E)
    emb = emb + kan[None]
    w = jax.nn.softmax(emb @ attn_w, axis=1)                            # (B, S, 1)
    attended = jnp.sum(emb * w, axis=1)
    mean_f = jnp.mean(emb, axis=1)
    max_f = jnp.max(emb, axis=1)
    return jnp.concatenate([attended, mean_f, max_f], axis=1)


if __name__ == "__main__":
    # Small shapes consistent with SequenceEncoder(num_events, embedding_dim, sequence_length)
    B, S, V, E = 2, 8, 6, 32
    num_splines, k = 5, 3
    C = num_splines + k  # number of B-spline basis functions

    key = jax.random.PRNGKey(0)
    k_emb, k_coef, k_attn, k_x = jax.random.split(key, 4)

    # Parameters (deterministic synthetic init; shapes match the PyTorch module's __init__)
    emb_table = jax.random.normal(k_emb, (V, E), dtype=jnp.float32)     # nn.Embedding weight

    # Sinusoidal positional encoding pe[S, E]
    position = jnp.arange(S, dtype=jnp.float32)[:, None]
    div_term = jnp.exp(jnp.arange(0, E, 2, dtype=jnp.float32) * -(math.log(10000.0) / E))
    pe = jnp.zeros((S, E), dtype=jnp.float32)
    pe = pe.at[:, 0::2].set(jnp.sin(position * div_term))
    pe = pe.at[:, 1::2].set(jnp.cos(position * div_term))

    # KANLayer(in_dim=1, out_dim=E, num=5, k=3, grid_range=[0,1],
    #          scale_base_mu=0, scale_base_sigma=0, scale_sp=1)
    base_grid = jnp.linspace(0.0, 1.0, num_splines + 1, dtype=jnp.float32)[None, :]  # (1, 6)
    kan_grid = extend_grid(base_grid, k)                                              # (1, 12)
    coef = 0.1 * jax.random.normal(k_coef, (1, E, C), dtype=jnp.float32)   # synthetic coef init
    coef_mat = coef[0].T                                                    # (C, E)
    scale_base = jnp.zeros((1, E), dtype=jnp.float32)   # mu = sigma = 0 in this config
    scale_sp = jnp.ones((1, E), dtype=jnp.float32)      # scale_sp * 1/sqrt(in_dim=1) * mask
    kan_mask = jnp.ones((1, E), dtype=jnp.float32)

    # Fixed KAN input positions and their B-spline basis (batch-independent glue)
    positions = jnp.linspace(0.0, 1.0, S, dtype=jnp.float32)[:, None]       # (S, 1)
    basis = b_batch(positions, kan_grid, k)[:, 0, :]                        # (S, C)

    # Attention projection (torch.randn at forward time -> deterministic init here)
    attn_w = jax.random.normal(k_attn, (E, 1), dtype=jnp.float32)

    # Input event indices
    x_idx = jax.random.randint(k_x, (B, S), 0, V, dtype=jnp.int32)

    out = sequence_encoder(x_idx, emb_table, pe, positions, basis, coef_mat,
                           scale_base, scale_sp, kan_mask, attn_w)
    out = jax.block_until_ready(out)

    ref = reference(x_idx, emb_table, pe, positions, basis, coef_mat,
                    scale_base, scale_sp, kan_mask, attn_w)

    assert out.shape == (B, 3 * E), out.shape
    assert jnp.allclose(out, ref, rtol=1e-4, atol=1e-4), float(jnp.max(jnp.abs(out - ref)))
    print("KERNEL_OK")
</pallas_src>

<mosaic_0001>
module attributes {stable_mosaic.version = 11 : i64} {
  func.func @seq_encoder_kernel(%arg0: i32, %arg1: memref<64xi32, #tpu.memory_space<smem>>, %arg2: memref<6x1x32xf32, #tpu.memory_space<vmem>>, %arg3: memref<8x1x32xf32, #tpu.memory_space<vmem>>, %arg4: memref<1x32xf32, #tpu.memory_space<vmem>>, %arg5: memref<8x128xf32, #tpu.memory_space<vmem>>, %arg6: memref<8x32xf32, #tpu.memory_space<vmem>>) attributes {dimension_semantics = [#tpu.dimension_semantics<parallel>], iteration_bounds = array<i64: 1>, scalar_prefetch = 1 : i64, scratch_operands = 1 : i64, tpu.core_type = #tpu.core_type<tc>, window_params = [{pipeline_mode = #tpu.pipeline_mode<synchronous>, transform_indices = @transform_0, window_bounds = array<i64: 6, 1, 32>}, {pipeline_mode = #tpu.pipeline_mode<synchronous>, transform_indices = @transform_1, window_bounds = array<i64: 8, 1, 32>}, {pipeline_mode = #tpu.pipeline_mode<synchronous>, transform_indices = @transform_2, window_bounds = array<i64: 1, 32>}, {transform_indices = @transform_3, window_bounds = array<i64: 8, 128>}]} {
    %c64_i32 = arith.constant 64 : i32
    %0 = arith.muli %arg0, %c64_i32 : i32
    %c0 = arith.constant 0 : index
    %c0_0 = arith.constant 0 : index
    %1 = vector.load %arg4[%c0, %c0_0] : memref<1x32xf32, #tpu.memory_space<vmem>>, vector<1x32xf32>
    %cst = arith.constant 0xFF800000 : f32
    %2 = vector.broadcast %cst : f32 to vector<8x1xf32>
    %cst_1 = arith.constant 0.000000e+00 : f32
    %3 = vector.broadcast %cst_1 : f32 to vector<8x1xf32>
    %cst_2 = arith.constant 0.000000e+00 : f32
    %4 = vector.broadcast %cst_2 : f32 to vector<8x32xf32>
    %cst_3 = arith.constant 0.000000e+00 : f32
    %5 = vector.broadcast %cst_3 : f32 to vector<8x32xf32>
    %cst_4 = arith.constant 0xFF800000 : f32
    %6 = vector.broadcast %cst_4 : f32 to vector<8x32xf32>
    %c0_i32 = arith.constant 0 : i32
    %c0_i32_5 = arith.constant 0 : i32
    %7 = arith.addi %0, %c0_i32_5 : i32
    %8 = arith.addi %7, %c0_i32 : i32
    %9 = arith.index_cast %8 : i32 to index
    %10 = memref.load %arg1[%9] : memref<64xi32, #tpu.memory_space<smem>>
    %11 = arith.index_cast %10 : i32 to index
    %c0_6 = arith.constant 0 : index
    %c0_7 = arith.constant 0 : index
    %12 = vector.load %arg2[%11, %c0_6, %c0_7] : memref<6x1x32xf32, #tpu.memory_space<vmem>>, vector<1x1x32xf32>
    %13 = vector.shape_cast %12 : vector<1x1x32xf32> to vector<1x32xf32>
    %c0_8 = arith.constant 0 : index
    %c0_9 = arith.constant 0 : index
    %14 = vector.load %arg6[%c0_8, %c0_9] : memref<8x32xf32, #tpu.memory_space<vmem>>, vector<1x32xf32>
    tpu.vector_store %arg6[%c0_8, %c0_9], %13 {strides = array<i32>} : memref<8x32xf32, #tpu.memory_space<vmem>>, vector<1x32xf32>,
    %c8_i32 = arith.constant 8 : i32
    %15 = arith.addi %0, %c8_i32 : i32
    %16 = arith.addi %15, %c0_i32 : i32
    %17 = arith.index_cast %16 : i32 to index
    %18 = memref.load %arg1[%17] : memref<64xi32, #tpu.memory_space<smem>>
    %19 = arith.index_cast %18 : i32 to index
    %c0_10 = arith.constant 0 : index
    %c0_11 = arith.constant 0 : index
    %20 = vector.load %arg2[%19, %c0_10, %c0_11] : memref<6x1x32xf32, #tpu.memory_space<vmem>>, vector<1x1x32xf32>
    %21 = vector.shape_cast %20 : vector<1x1x32xf32> to vector<1x32xf32>
    %c1 = arith.constant 1 : index
    %c0_12 = arith.constant 0 : index
    %22 = vector.load %arg6[%c1, %c0_12] : memref<8x32xf32, #tpu.memory_space<vmem>>, vector<1x32xf32>
    tpu.vector_store %arg6[%c1, %c0_12], %21 {strides = array<i32>} : memref<8x32xf32, #tpu.memory_space<vmem>>, vector<1x32xf32>,
    %c16_i32 = arith.constant 16 : i32
    %23 = arith.addi %0, %c16_i32 : i32
    %24 = arith.addi %23, %c0_i32 : i32
    %25 = arith.index_cast %24 : i32 to index
    %26 = memref.load %arg1[%25] : memref<64xi32, #tpu.memory_space<smem>>
    %27 = arith.index_cast %26 : i32 to index
    %c0_13 = arith.constant 0 : index
    %c0_14 = arith.constant 0 : index
    %28 = vector.load %arg2[%27, %c0_13, %c0_14] : memref<6x1x32xf32, #tpu.memory_space<vmem>>, vector<1x1x32xf32>
    %29 = vector.shape_cast %28 : vector<1x1x32xf32> to vector<1x32xf32>
    %c2 = arith.constant 2 : index
    %c0_15 = arith.constant 0 : index
    %30 = vector.load %arg6[%c2, %c0_15] : memref<8x32xf32, #tpu.memory_space<vmem>>, vector<1x32xf32>
    tpu.vector_store %arg6[%c2, %c0_15], %29 {strides = array<i32>} : memref<8x32xf32, #tpu.memory_space<vmem>>, vector<1x32xf32>,
    %c24_i32 = arith.constant 24 : i32
    %31 = arith.addi %0, %c24_i32 : i32
    %32 = arith.addi %31, %c0_i32 : i32
    %33 = arith.index_cast %32 : i32 to index
    %34 = memref.load %arg1[%33] : memref<64xi32, #tpu.memory_space<smem>>
    %35 = arith.index_cast %34 : i32 to index
    %c0_16 = arith.constant 0 : index
    %c0_17 = arith.constant 0 : index
    %36 = vector.load %arg2[%35, %c0_16, %c0_17] : memref<6x1x32xf32, #tpu.memory_space<vmem>>, vector<1x1x32xf32>
    %37 = vector.shape_cast %36 : vector<1x1x32xf32> to vector<1x32xf32>
    %c3 = arith.constant 3 : index
    %c0_18 = arith.constant 0 : index
    %38 = vector.load %arg6[%c3, %c0_18] : memref<8x32xf32, #tpu.memory_space<vmem>>, vector<1x32xf32>
    tpu.vector_store %arg6[%c3, %c0_18], %37 {strides = array<i32>} : memref<8x32xf32, #tpu.memory_space<vmem>>, vector<1x32xf32>,
    %c32_i32 = arith.constant 32 : i32
    %39 = arith.addi %0, %c32_i32 : i32
    %40 = arith.addi %39, %c0_i32 : i32
    %41 = arith.index_cast %40 : i32 to index
    %42 = memref.load %arg1[%41] : memref<64xi32, #tpu.memory_space<smem>>
    %43 = arith.index_cast %42 : i32 to index
    %c0_19 = arith.constant 0 : index
    %c0_20 = arith.constant 0 : index
    %44 = vector.load %arg2[%43, %c0_19, %c0_20] : memref<6x1x32xf32, #tpu.memory_space<vmem>>, vector<1x1x32xf32>
    %45 = vector.shape_cast %44 : vector<1x1x32xf32> to vector<1x32xf32>
    %c4 = arith.constant 4 : index
    %c0_21 = arith.constant 0 : index
    %46 = vector.load %arg6[%c4, %c0_21] : memref<8x32xf32, #tpu.memory_space<vmem>>, vector<1x32xf32>
    tpu.vector_store %arg6[%c4, %c0_21], %45 {strides = array<i32>} : memref<8x32xf32, #tpu.memory_space<vmem>>, vector<1x32xf32>,
    %c40_i32 = arith.constant 40 : i32
    %47 = arith.addi %0, %c40_i32 : i32
    %48 = arith.addi %47, %c0_i32 : i32
    %49 = arith.index_cast %48 : i32 to index
    %50 = memref.load %arg1[%49] : memref<64xi32, #tpu.memory_space<smem>>
    %51 = arith.index_cast %50 : i32 to index
    %c0_22 = arith.constant 0 : index
    %c0_23 = arith.constant 0 : index
    %52 = vector.load %arg2[%51, %c0_22, %c0_23] : memref<6x1x32xf32, #tpu.memory_space<vmem>>, vector<1x1x32xf32>
    %53 = vector.shape_cast %52 : vector<1x1x32xf32> to vector<1x32xf32>
    %c5 = arith.constant 5 : index
    %c0_24 = arith.constant 0 : index
    %54 = vector.load %arg6[%c5, %c0_24] : memref<8x32xf32, #tpu.memory_space<vmem>>, vector<1x32xf32>
    tpu.vector_store %arg6[%c5, %c0_24], %53 {strides = array<i32>} : memref<8x32xf32, #tpu.memory_space<vmem>>, vector<1x32xf32>,
    %c48_i32 = arith.constant 48 : i32
    %55 = arith.addi %0, %c48_i32 : i32
    %56 = arith.addi %55, %c0_i32 : i32
    %57 = arith.index_cast %56 : i32 to index
    %58 = memref.load %arg1[%57] : memref<64xi32, #tpu.memory_space<smem>>
    %59 = arith.index_cast %58 : i32 to index
    %c0_25 = arith.constant 0 : index
    %c0_26 = arith.constant 0 : index
    %60 = vector.load %arg2[%59, %c0_25, %c0_26] : memref<6x1x32xf32, #tpu.memory_space<vmem>>, vector<1x1x32xf32>
    %61 = vector.shape_cast %60 : vector<1x1x32xf32> to vector<1x32xf32>
    %c6 = arith.constant 6 : index
    %c0_27 = arith.constant 0 : index
    %62 = vector.load %arg6[%c6, %c0_27] : memref<8x32xf32, #tpu.memory_space<vmem>>, vector<1x32xf32>
    tpu.vector_store %arg6[%c6, %c0_27], %61 {strides = array<i32>} : memref<8x32xf32, #tpu.memory_space<vmem>>, vector<1x32xf32>,
    %c56_i32 = arith.constant 56 : i32
    %63 = arith.addi %0, %c56_i32 : i32
    %64 = arith.addi %63, %c0_i32 : i32
    %65 = arith.index_cast %64 : i32 to index
    %66 = memref.load %arg1[%65] : memref<64xi32, #tpu.memory_space<smem>>
    %67 = arith.index_cast %66 : i32 to index
    %c0_28 = arith.constant 0 : index
    %c0_29 = arith.constant 0 : index
    %68 = vector.load %arg2[%67, %c0_28, %c0_29] : memref<6x1x32xf32, #tpu.memory_space<vmem>>, vector<1x1x32xf32>
    %69 = vector.shape_cast %68 : vector<1x1x32xf32> to vector<1x32xf32>
    %c7 = arith.constant 7 : index
    %c0_30 = arith.constant 0 : index
    %70 = vector.load %arg6[%c7, %c0_30] : memref<8x32xf32, #tpu.memory_space<vmem>>, vector<1x32xf32>
    tpu.vector_store %arg6[%c7, %c0_30], %69 {strides = array<i32>} : memref<8x32xf32, #tpu.memory_space<vmem>>, vector<1x32xf32>,
    %c0_31 = arith.constant 0 : index
    %c0_32 = arith.constant 0 : index
    %71 = vector.load %arg6[%c0_31, %c0_32] : memref<8x32xf32, #tpu.memory_space<vmem>>, vector<8x32xf32>
    %72 = arith.index_cast %c0_i32 : i32 to index
    %c0_33 = arith.constant 0 : index
    %c0_34 = arith.constant 0 : index
    %73 = vector.load %arg3[%72, %c0_33, %c0_34] : memref<8x1x32xf32, #tpu.memory_space<vmem>>, vector<1x1x32xf32>
    %74 = vector.shape_cast %73 : vector<1x1x32xf32> to vector<1x32xf32>
    %75 = vector.broadcast %74 : vector<1x32xf32> to vector<8x32xf32>
    %76 = arith.addf %71, %75 : vector<8x32xf32>
    %77 = vector.broadcast %1 : vector<1x32xf32> to vector<8x32xf32>
    %78 = arith.mulf %76, %77 : vector<8x32xf32>
    %cst_35 = arith.constant dense<0.000000e+00> : vector<8xf32>
    %79 = vector.multi_reduction <add>, %78, %cst_35 [1] : vector<8x32xf32> to vector<8xf32>
    %80 = vector.shape_cast %79 : vector<8xf32> to vector<8x1xf32>
    %81 = arith.maximumf %2, %80 : vector<8x1xf32>
    %82 = arith.subf %2, %81 : vector<8x1xf32>
    %83 = math.exp %82 : vector<8x1xf32>
    %84 = arith.subf %80, %81 : vector<8x1xf32>
    %85 = math.exp %84 : vector<8x1xf32>
    %86 = arith.mulf %83, %3 : vector<8x1xf32>
    %87 = arith.addf %86, %85 : vector<8x1xf32>
    %88 = vector.broadcast %83 : vector<8x1xf32> to vector<8x32xf32>
    %89 = arith.mulf %88, %4 : vector<8x32xf32>
    %90 = vector.broadcast %85 : vector<8x1xf32> to vector<8x32xf32>
    %91 = arith.mulf %90, %76 : vector<8x32xf32>
    %92 = arith.addf %89, %91 : vector<8x32xf32>
    %93 = arith.addf %5, %76 : vector<8x32xf32>
    %94 = arith.maximumf %6, %76 : vector<8x32xf32>
    %c1_i32 = arith.constant 1 : i32
    %c0_i32_36 = arith.constant 0 : i32
    %95 = arith.addi %0, %c0_i32_36 : i32
    %96 = arith.addi %95, %c1_i32 : i32
    %97 = arith.index_cast %96 : i32 to index
    %98 = memref.load %arg1[%97] : memref<64xi32, #tpu.memory_space<smem>>
    %99 = arith.index_cast %98 : i32 to index
    %c0_37 = arith.constant 0 : index
    %c0_38 = arith.constant 0 : index
    %100 = vector.load %arg2[%99, %c0_37, %c0_38] : memref<6x1x32xf32, #tpu.memory_space<vmem>>, vector<1x1x32xf32>
    %101 = vector.shape_cast %100 : vector<1x1x32xf32> to vector<1x32xf32>
    %c0_39 = arith.constant 0 : index
    %c0_40 = arith.constant 0 : index
    %102 = vector.load %arg6[%c0_39, %c0_40] : memref<8x32xf32, #tpu.memory_space<vmem>>, vector<1x32xf32>
    tpu.vector_store %arg6[%c0_39, %c0_40], %101 {strides = array<i32>} : memref<8x32xf32, #tpu.memory_space<vmem>>, vector<1x32xf32>,
    %c8_i32_41 = arith.constant 8 : i32
    %103 = arith.addi %0, %c8_i32_41 : i32
    %104 = arith.addi %103, %c1_i32 : i32
    %105 = arith.index_cast %104 : i32 to index
    %106 = memref.load %arg1[%105] : memref<64xi32, #tpu.memory_space<smem>>
    %107 = arith.index_cast %106 : i32 to index
    %c0_42 = arith.constant 0 : index
    %c0_43 = arith.constant 0 : index
    %108 = vector.load %arg2[%107, %c0_42, %c0_43] : memref<6x1x32xf32, #tpu.memory_space<vmem>>, vector<1x1x32xf32>
    %109 = vector.shape_cast %108 : vector<1x1x32xf32> to vector<1x32xf32>
    %c1_44 = arith.constant 1 : index
    %c0_45 = arith.constant 0 : index
    %110 = vector.load %arg6[%c1_44, %c0_45] : memref<8x32xf32, #tpu.memory_space<vmem>>, vector<1x32xf32>
    tpu.vector_store %arg6[%c1_44, %c0_45], %109 {strides = array<i32>} : memref<8x32xf32, #tpu.memory_space<vmem>>, vector<1x32xf32>,
    %c16_i32_46 = arith.constant 16 : i32
    %111 = arith.addi %0, %c16_i32_46 : i32
    %112 = arith.addi %111, %c1_i32 : i32
    %113 = arith.index_cast %112 : i32 to index
    %114 = memref.load %arg1[%113] : memref<64xi32, #tpu.memory_space<smem>>
    %115 = arith.index_cast %114 : i32 to index
    %c0_47 = arith.constant 0 : index
    %c0_48 = arith.constant 0 : index
    %116 = vector.load %arg2[%115, %c0_47, %c0_48] : memref<6x1x32xf32, #tpu.memory_space<vmem>>, vector<1x1x32xf32>
    %117 = vector.shape_cast %116 : vector<1x1x32xf32> to vector<1x32xf32>
    %c2_49 = arith.constant 2 : index
    %c0_50 = arith.constant 0 : index
    %118 = vector.load %arg6[%c2_49, %c0_50] : memref<8x32xf32, #tpu.memory_space<vmem>>, vector<1x32xf32>
    tpu.vector_store %arg6[%c2_49, %c0_50], %117 {strides = array<i32>} : memref<8x32xf32, #tpu.memory_space<vmem>>, vector<1x32xf32>,
    %c24_i32_51 = arith.constant 24 : i32
    %119 = arith.addi %0, %c24_i32_51 : i32
    %120 = arith.addi %119, %c1_i32 : i32
    %121 = arith.index_cast %120 : i32 to index
    %122 = memref.load %arg1[%121] : memref<64xi32, #tpu.memory_space<smem>>
    %123 = arith.index_cast %122 : i32 to index
    %c0_52 = arith.constant 0 : index
    %c0_53 = arith.constant 0 : index
    %124 = vector.load %arg2[%123, %c0_52, %c0_53] : memref<6x1x32xf32, #tpu.memory_space<vmem>>, vector<1x1x32xf32>
    %125 = vector.shape_cast %124 : vector<1x1x32xf32> to vector<1x32xf32>
    %c3_54 = arith.constant 3 : index
    %c0_55 = arith.constant 0 : index
    %126 = vector.load %arg6[%c3_54, %c0_55] : memref<8x32xf32, #tpu.memory_space<vmem>>, vector<1x32xf32>
    tpu.vector_store %arg6[%c3_54, %c0_55], %125 {strides = array<i32>} : memref<8x32xf32, #tpu.memory_space<vmem>>, vector<1x32xf32>,
    %c32_i32_56 = arith.constant 32 : i32
    %127 = arith.addi %0, %c32_i32_56 : i32
    %128 = arith.addi %127, %c1_i32 : i32
    %129 = arith.index_cast %128 : i32 to index
    %130 = memref.load %arg1[%129] : memref<64xi32, #tpu.memory_space<smem>>
    %131 = arith.index_cast %130 : i32 to index
    %c0_57 = arith.constant 0 : index
    %c0_58 = arith.constant 0 : index
    %132 = vector.load %arg2[%131, %c0_57, %c0_58] : memref<6x1x32xf32, #tpu.memory_space<vmem>>, vector<1x1x32xf32>
    %133 = vector.shape_cast %132 : vector<1x1x32xf32> to vector<1x32xf32>
    %c4_59 = arith.constant 4 : index
    %c0_60 = arith.constant 0 : index
    %134 = vector.load %arg6[%c4_59, %c0_60] : memref<8x32xf32, #tpu.memory_space<vmem>>, vector<1x32xf32>
    tpu.vector_store %arg6[%c4_59, %c0_60], %133 {strides = array<i32>} : memref<8x32xf32, #tpu.memory_space<vmem>>, vector<1x32xf32>,
    %c40_i32_61 = arith.constant 40 : i32
    %135 = arith.addi %0, %c40_i32_61 : i32
    %136 = arith.addi %135, %c1_i32 : i32
    %137 = arith.index_cast %136 : i32 to index
    %138 = memref.load %arg1[%137] : memref<64xi32, #tpu.memory_space<smem>>
    %139 = arith.index_cast %138 : i32 to index
    %c0_62 = arith.constant 0 : index
    %c0_63 = arith.constant 0 : index
    %140 = vector.load %arg2[%139, %c0_62, %c0_63] : memref<6x1x32xf32, #tpu.memory_space<vmem>>, vector<1x1x32xf32>
    %141 = vector.shape_cast %140 : vector<1x1x32xf32> to vector<1x32xf32>
    %c5_64 = arith.constant 5 : index
    %c0_65 = arith.constant 0 : index
    %142 = vector.load %arg6[%c5_64, %c0_65] : memref<8x32xf32, #tpu.memory_space<vmem>>, vector<1x32xf32>
    tpu.vector_store %arg6[%c5_64, %c0_65], %141 {strides = array<i32>} : memref<8x32xf32, #tpu.memory_space<vmem>>, vector<1x32xf32>,
    %c48_i32_66 = arith.constant 48 : i32
    %143 = arith.addi %0, %c48_i32_66 : i32
    %144 = arith.addi %143, %c1_i32 : i32
    %145 = arith.index_cast %144 : i32 to index
    %146 = memref.load %arg1[%145] : memref<64xi32, #tpu.memory_space<smem>>
    %147 = arith.index_cast %146 : i32 to index
    %c0_67 = arith.constant 0 : index
    %c0_68 = arith.constant 0 : index
    %148 = vector.load %arg2[%147, %c0_67, %c0_68] : memref<6x1x32xf32, #tpu.memory_space<vmem>>, vector<1x1x32xf32>
    %149 = vector.shape_cast %148 : vector<1x1x32xf32> to vector<1x32xf32>
    %c6_69 = arith.constant 6 : index
    %c0_70 = arith.constant 0 : index
    %150 = vector.load %arg6[%c6_69, %c0_70] : memref<8x32xf32, #tpu.memory_space<vmem>>, vector<1x32xf32>
    tpu.vector_store %arg6[%c6_69, %c0_70], %149 {strides = array<i32>} : memref<8x32xf32, #tpu.memory_space<vmem>>, vector<1x32xf32>,
    %c56_i32_71 = arith.constant 56 : i32
    %151 = arith.addi %0, %c56_i32_71 : i32
    %152 = arith.addi %151, %c1_i32 : i32
    %153 = arith.index_cast %152 : i32 to index
    %154 = memref.load %arg1[%153] : memref<64xi32, #tpu.memory_space<smem>>
    %155 = arith.index_cast %154 : i32 to index
    %c0_72 = arith.constant 0 : index
    %c0_73 = arith.constant 0 : index
    %156 = vector.load %arg2[%155, %c0_72, %c0_73] : memref<6x1x32xf32, #tpu.memory_space<vmem>>, vector<1x1x32xf32>
    %157 = vector.shape_cast %156 : vector<1x1x32xf32> to vector<1x32xf32>
    %c7_74 = arith.constant 7 : index
    %c0_75 = arith.constant 0 : index
    %158 = vector.load %arg6[%c7_74, %c0_75] : memref<8x32xf32, #tpu.memory_space<vmem>>, vector<1x32xf32>
    tpu.vector_store %arg6[%c7_74, %c0_75], %157 {strides = array<i32>} : memref<8x32xf32, #tpu.memory_space<vmem>>, vector<1x32xf32>,
    %c0_76 = arith.constant 0 : index
    %c0_77 = arith.constant 0 : index
    %159 = vector.load %arg6[%c0_76, %c0_77] : memref<8x32xf32, #tpu.memory_space<vmem>>, vector<8x32xf32>
    %160 = arith.index_cast %c1_i32 : i32 to index
    %c0_78 = arith.constant 0 : index
    %c0_79 = arith.constant 0 : index
    %161 = vector.load %arg3[%160, %c0_78, %c0_79] : memref<8x1x32xf32, #tpu.memory_space<vmem>>, vector<1x1x32xf32>
    %162 = vector.shape_cast %161 : vector<1x1x32xf32> to vector<1x32xf32>
    %163 = vector.broadcast %162 : vector<1x32xf32> to vector<8x32xf32>
    %164 = arith.addf %159, %163 : vector<8x32xf32>
    %165 = vector.broadcast %1 : vector<1x32xf32> to vector<8x32xf32>
    %166 = arith.mulf %164, %165 : vector<8x32xf32>
    %cst_80 = arith.constant dense<0.000000e+00> : vector<8xf32>
    %167 = vector.multi_reduction <add>, %166, %cst_80 [1] : vector<8x32xf32> to vector<8xf32>
    %168 = vector.shape_cast %167 : vector<8xf32> to vector<8x1xf32>
    %169 = arith.maximumf %81, %168 : vector<8x1xf32>
    %170 = arith.subf %81, %169 : vector<8x1xf32>
    %171 = math.exp %170 : vector<8x1xf32>
    %172 = arith.subf %168, %169 : vector<8x1xf32>
    %173 = math.exp %172 : vector<8x1xf32>
    %174 = arith.mulf %171, %87 : vector<8x1xf32>
    %175 = arith.addf %174, %173 : vector<8x1xf32>
    %176 = vector.broadcast %171 : vector<8x1xf32> to vector<8x32xf32>
    %177 = arith.mulf %176, %92 : vector<8x32xf32>
    %178 = vector.broadcast %173 : vector<8x1xf32> to vector<8x32xf32>
    %179 = arith.mulf %178, %164 : vector<8x32xf32>
    %180 = arith.addf %177, %179 : vector<8x32xf32>
    %181 = arith.addf %93, %164 : vector<8x32xf32>
    %182 = arith.maximumf %94, %164 : vector<8x32xf32>
    %c2_i32 = arith.constant 2 : i32
    %c0_i32_81 = arith.constant 0 : i32
    %183 = arith.addi %0, %c0_i32_81 : i32
    %184 = arith.addi %183, %c2_i32 : i32
    %185 = arith.index_cast %184 : i32 to index
    %186 = memref.load %arg1[%185] : memref<64xi32, #tpu.memory_space<smem>>
    %187 = arith.index_cast %186 : i32 to index
    %c0_82 = arith.constant 0 : index
    %c0_83 = arith.constant 0 : index
    %188 = vector.load %arg2[%187, %c0_82, %c0_83] : memref<6x1x32xf32, #tpu.memory_space<vmem>>, vector<1x1x32xf32>
    %189 = vector.shape_cast %188 : vector<1x1x32xf32> to vector<1x32xf32>
    %c0_84 = arith.constant 0 : index
    %c0_85 = arith.constant 0 : index
    %190 = vector.load %arg6[%c0_84, %c0_85] : memref<8x32xf32, #tpu.memory_space<vmem>>, vector<1x32xf32>
    tpu.vector_store %arg6[%c0_84, %c0_85], %189 {strides = array<i32>} : memref<8x32xf32, #tpu.memory_space<vmem>>, vector<1x32xf32>,
    %c8_i32_86 = arith.constant 8 : i32
    %191 = arith.addi %0, %c8_i32_86 : i32
    %192 = arith.addi %191, %c2_i32 : i32
    %193 = arith.index_cast %192 : i32 to index
    %194 = memref.load %arg1[%193] : memref<64xi32, #tpu.memory_space<smem>>
    %195 = arith.index_cast %194 : i32 to index
    %c0_87 = arith.constant 0 : index
    %c0_88 = arith.constant 0 : index
    %196 = vector.load %arg2[%195, %c0_87, %c0_88] : memref<6x1x32xf32, #tpu.memory_space<vmem>>, vector<1x1x32xf32>
    %197 = vector.shape_cast %196 : vector<1x1x32xf32> to vector<1x32xf32>
    %c1_89 = arith.constant 1 : index
    %c0_90 = arith.constant 0 : index
    %198 = vector.load %arg6[%c1_89, %c0_90] : memref<8x32xf32, #tpu.memory_space<vmem>>, vector<1x32xf32>
    tpu.vector_store %arg6[%c1_89, %c0_90], %197 {strides = array<i32>} : memref<8x32xf32, #tpu.memory_space<vmem>>, vector<1x32xf32>,
    %c16_i32_91 = arith.constant 16 : i32
    %199 = arith.addi %0, %c16_i32_91 : i32
    %200 = arith.addi %199, %c2_i32 : i32
    %201 = arith.index_cast %200 : i32 to index
    %202 = memref.load %arg1[%201] : memref<64xi32, #tpu.memory_space<smem>>
    %203 = arith.index_cast %202 : i32 to index
    %c0_92 = arith.constant 0 : index
    %c0_93 = arith.constant 0 : index
    %204 = vector.load %arg2[%203, %c0_92, %c0_93] : memref<6x1x32xf32, #tpu.memory_space<vmem>>, vector<1x1x32xf32>
    %205 = vector.shape_cast %204 : vector<1x1x32xf32> to vector<1x32xf32>
    %c2_94 = arith.constant 2 : index
    %c0_95 = arith.constant 0 : index
    %206 = vector.load %arg6[%c2_94, %c0_95] : memref<8x32xf32, #tpu.memory_space<vmem>>, vector<1x32xf32>
    tpu.vector_store %arg6[%c2_94, %c0_95], %205 {strides = array<i32>} : memref<8x32xf32, #tpu.memory_space<vmem>>, vector<1x32xf32>,
    %c24_i32_96 = arith.constant 24 : i32
    %207 = arith.addi %0, %c24_i32_96 : i32
    %208 = arith.addi %207, %c2_i32 : i32
    %209 = arith.index_cast %208 : i32 to index
    %210 = memref.load %arg1[%209] : memref<64xi32, #tpu.memory_space<smem>>
    %211 = arith.index_cast %210 : i32 to index
    %c0_97 = arith.constant 0 : index
    %c0_98 = arith.constant 0 : index
    %212 = vector.load %arg2[%211, %c0_97, %c0_98] : memref<6x1x32xf32, #tpu.memory_space<vmem>>, vector<1x1x32xf32>
    %213 = vector.shape_cast %212 : vector<1x1x32xf32> to vector<1x32xf32>
    %c3_99 = arith.constant 3 : index
    %c0_100 = arith.constant 0 : index
    %214 = vector.load %arg6[%c3_99, %c0_100] : memref<8x32xf32, #tpu.memory_space<vmem>>, vector<1x32xf32>
    tpu.vector_store %arg6[%c3_99, %c0_100], %213 {strides = array<i32>} : memref<8x32xf32, #tpu.memory_space<vmem>>, vector<1x32xf32>,
    %c32_i32_101 = arith.constant 32 : i32
    %215 = arith.addi %0, %c32_i32_101 : i32
    %216 = arith.addi %215, %c2_i32 : i32
    %217 = arith.index_cast %216 : i32 to index
    %218 = memref.load %arg1[%217] : memref<64xi32, #tpu.memory_space<smem>>
    %219 = arith.index_cast %218 : i32 to index
    %c0_102 = arith.constant 0 : index
    %c0_103 = arith.constant 0 : index
    %220 = vector.load %arg2[%219, %c0_102, %c0_103] : memref<6x1x32xf32, #tpu.memory_space<vmem>>, vector<1x1x32xf32>
    %221 = vector.shape_cast %220 : vector<1x1x32xf32> to vector<1x32xf32>
    %c4_104 = arith.constant 4 : index
    %c0_105 = arith.constant 0 : index
    %222 = vector.load %arg6[%c4_104, %c0_105] : memref<8x32xf32, #tpu.memory_space<vmem>>, vector<1x32xf32>
    tpu.vector_store %arg6[%c4_104, %c0_105], %221 {strides = array<i32>} : memref<8x32xf32, #tpu.memory_space<vmem>>, vector<1x32xf32>,
    %c40_i32_106 = arith.constant 40 : i32
    %223 = arith.addi %0, %c40_i32_106 : i32
    %224 = arith.addi %223, %c2_i32 : i32
    %225 = arith.index_cast %224 : i32 to index
    %226 = memref.load %arg1[%225] : memref<64xi32, #tpu.memory_space<smem>>
    %227 = arith.index_cast %226 : i32 to index
    %c0_107 = arith.constant 0 : index
    %c0_108 = arith.constant 0 : index
    %228 = vector.load %arg2[%227, %c0_107, %c0_108] : memref<6x1x32xf32, #tpu.memory_space<vmem>>, vector<1x1x32xf32>
    %229 = vector.shape_cast %228 : vector<1x1x32xf32> to vector<1x32xf32>
    %c5_109 = arith.constant 5 : index
    %c0_110 = arith.constant 0 : index
    %230 = vector.load %arg6[%c5_109, %c0_110] : memref<8x32xf32, #tpu.memory_space<vmem>>, vector<1x32xf32>
    tpu.vector_store %arg6[%c5_109, %c0_110], %229 {strides = array<i32>} : memref<8x32xf32, #tpu.memory_space<vmem>>, vector<1x32xf32>,
    %c48_i32_111 = arith.constant 48 : i32
    %231 = arith.addi %0, %c48_i32_111 : i32
    %232 = arith.addi %231, %c2_i32 : i32
    %233 = arith.index_cast %232 : i32 to index
    %234 = memref.load %arg1[%233] : memref<64xi32, #tpu.memory_space<smem>>
    %235 = arith.index_cast %234 : i32 to index
    %c0_112 = arith.constant 0 : index
    %c0_113 = arith.constant 0 : index
    %236 = vector.load %arg2[%235, %c0_112, %c0_113] : memref<6x1x32xf32, #tpu.memory_space<vmem>>, vector<1x1x32xf32>
    %237 = vector.shape_cast %236 : vector<1x1x32xf32> to vector<1x32xf32>
    %c6_114 = arith.constant 6 : index
    %c0_115 = arith.constant 0 : index
    %238 = vector.load %arg6[%c6_114, %c0_115] : memref<8x32xf32, #tpu.memory_space<vmem>>, vector<1x32xf32>
    tpu.vector_store %arg6[%c6_114, %c0_115], %237 {strides = array<i32>} : memref<8x32xf32, #tpu.memory_space<vmem>>, vector<1x32xf32>,
    %c56_i32_116 = arith.constant 56 : i32
    %239 = arith.addi %0, %c56_i32_116 : i32
    %240 = arith.addi %239, %c2_i32 : i32
    %241 = arith.index_cast %240 : i32 to index
    %242 = memref.load %arg1[%241] : memref<64xi32, #tpu.memory_space<smem>>
    %243 = arith.index_cast %242 : i32 to index
    %c0_117 = arith.constant 0 : index
    %c0_118 = arith.constant 0 : index
    %244 = vector.load %arg2[%243, %c0_117, %c0_118] : memref<6x1x32xf32, #tpu.memory_space<vmem>>, vector<1x1x32xf32>
    %245 = vector.shape_cast %244 : vector<1x1x32xf32> to vector<1x32xf32>
    %c7_119 = arith.constant 7 : index
    %c0_120 = arith.constant 0 : index
    %246 = vector.load %arg6[%c7_119, %c0_120] : memref<8x32xf32, #tpu.memory_space<vmem>>, vector<1x32xf32>
    tpu.vector_store %arg6[%c7_119, %c0_120], %245 {strides = array<i32>} : memref<8x32xf32, #tpu.memory_space<vmem>>, vector<1x32xf32>,
    %c0_121 = arith.constant 0 : index
    %c0_122 = arith.constant 0 : index
    %247 = vector.load %arg6[%c0_121, %c0_122] : memref<8x32xf32, #tpu.memory_space<vmem>>, vector<8x32xf32>
    %248 = arith.index_cast %c2_i32 : i32 to index
    %c0_123 = arith.constant 0 : index
    %c0_124 = arith.constant 0 : index
    %249 = vector.load %arg3[%248, %c0_123, %c0_124] : memref<8x1x32xf32, #tpu.memory_space<vmem>>, vector<1x1x32xf32>
    %250 = vector.shape_cast %249 : vector<1x1x32xf32> to vector<1x32xf32>
    %251 = vector.broadcast %250 : vector<1x32xf32> to vector<8x32xf32>
    %252 = arith.addf %247, %251 : vector<8x32xf32>
    %253 = vector.broadcast %1 : vector<1x32xf32> to vector<8x32xf32>
    %254 = arith.mulf %252, %253 : vector<8x32xf32>
    %cst_125 = arith.constant dense<0.000000e+00> : vector<8xf32>
    %255 = vector.multi_reduction <add>, %254, %cst_125 [1] : vector<8x32xf32> to vector<8xf32>
    %256 = vector.shape_cast %255 : vector<8xf32> to vector<8x1xf32>
    %257 = arith.maximumf %169, %256 : vector<8x1xf32>
    %258 = arith.subf %169, %257 : vector<8x1xf32>
    %259 = math.exp %258 : vector<8x1xf32>
    %260 = arith.subf %256, %257 : vector<8x1xf32>
    %261 = math.exp %260 : vector<8x1xf32>
    %262 = arith.mulf %259, %175 : vector<8x1xf32>
    %263 = arith.addf %262, %261 : vector<8x1xf32>
    %264 = vector.broadcast %259 : vector<8x1xf32> to vector<8x32xf32>
    %265 = arith.mulf %264, %180 : vector<8x32xf32>
    %266 = vector.broadcast %261 : vector<8x1xf32> to vector<8x32xf32>
    %267 = arith.mulf %266, %252 : vector<8x32xf32>
    %268 = arith.addf %265, %267 : vector<8x32xf32>
    %269 = arith.addf %181, %252 : vector<8x32xf32>
    %270 = arith.maximumf %182, %252 : vector<8x32xf32>
    %c3_i32 = arith.constant 3 : i32
    %c0_i32_126 = arith.constant 0 : i32
    %271 = arith.addi %0, %c0_i32_126 : i32
    %272 = arith.addi %271, %c3_i32 : i32
    %273 = arith.index_cast %272 : i32 to index
    %274 = memref.load %arg1[%273] : memref<64xi32, #tpu.memory_space<smem>>
    %275 = arith.index_cast %274 : i32 to index
    %c0_127 = arith.constant 0 : index
    %c0_128 = arith.constant 0 : index
    %276 = vector.load %arg2[%275, %c0_127, %c0_128] : memref<6x1x32xf32, #tpu.memory_space<vmem>>, vector<1x1x32xf32>
    %277 = vector.shape_cast %276 : vector<1x1x32xf32> to vector<1x32xf32>
    %c0_129 = arith.constant 0 : index
    %c0_130 = arith.constant 0 : index
    %278 = vector.load %arg6[%c0_129, %c0_130] : memref<8x32xf32, #tpu.memory_space<vmem>>, vector<1x32xf32>
    tpu.vector_store %arg6[%c0_129, %c0_130], %277 {strides = array<i32>} : memref<8x32xf32, #tpu.memory_space<vmem>>, vector<1x32xf32>,
    %c8_i32_131 = arith.constant 8 : i32
    %279 = arith.addi %0, %c8_i32_131 : i32
    %280 = arith.addi %279, %c3_i32 : i32
    %281 = arith.index_cast %280 : i32 to index
    %282 = memref.load %arg1[%281] : memref<64xi32, #tpu.memory_space<smem>>
    %283 = arith.index_cast %282 : i32 to index
    %c0_132 = arith.constant 0 : index
    %c0_133 = arith.constant 0 : index
    %284 = vector.load %arg2[%283, %c0_132, %c0_133] : memref<6x1x32xf32, #tpu.memory_space<vmem>>, vector<1x1x32xf32>
    %285 = vector.shape_cast %284 : vector<1x1x32xf32> to vector<1x32xf32>
    %c1_134 = arith.constant 1 : index
    %c0_135 = arith.constant 0 : index
    %286 = vector.load %arg6[%c1_134, %c0_135] : memref<8x32xf32, #tpu.memory_space<vmem>>, vector<1x32xf32>
    tpu.vector_store %arg6[%c1_134, %c0_135], %285 {strides = array<i32>} : memref<8x32xf32, #tpu.memory_space<vmem>>, vector<1x32xf32>,
    %c16_i32_136 = arith.constant 16 : i32
    %287 = arith.addi %0, %c16_i32_136 : i32
    %288 = arith.addi %287, %c3_i32 : i32
    %289 = arith.index_cast %288 : i32 to index
    %290 = memref.load %arg1[%289] : memref<64xi32, #tpu.memory_space<smem>>
    %291 = arith.index_cast %290 : i32 to index
    %c0_137 = arith.constant 0 : index
    %c0_138 = arith.constant 0 : index
    %292 = vector.load %arg2[%291, %c0_137, %c0_138] : memref<6x1x32xf32, #tpu.memory_space<vmem>>, vector<1x1x32xf32>
    %293 = vector.shape_cast %292 : vector<1x1x32xf32> to vector<1x32xf32>
    %c2_139 = arith.constant 2 : index
    %c0_140 = arith.constant 0 : index
    %294 = vector.load %arg6[%c2_139, %c0_140] : memref<8x32xf32, #tpu.memory_space<vmem>>, vector<1x32xf32>
    tpu.vector_store %arg6[%c2_139, %c0_140], %293 {strides = array<i32>} : memref<8x32xf32, #tpu.memory_space<vmem>>, vector<1x32xf32>,
    %c24_i32_141 = arith.constant 24 : i32
    %295 = arith.addi %0, %c24_i32_141 : i32
    %296 = arith.addi %295, %c3_i32 : i32
    %297 = arith.index_cast %296 : i32 to index
    %298 = memref.load %arg1[%297] : memref<64xi32, #tpu.memory_space<smem>>
    %299 = arith.index_cast %298 : i32 to index
    %c0_142 = arith.constant 0 : index
    %c0_143 = arith.constant 0 : index
    %300 = vector.load %arg2[%299, %c0_142, %c0_143] : memref<6x1x32xf32, #tpu.memory_space<vmem>>, vector<1x1x32xf32>
    %301 = vector.shape_cast %300 : vector<1x1x32xf32> to vector<1x32xf32>
    %c3_144 = arith.constant 3 : index
    %c0_145 = arith.constant 0 : index
    %302 = vector.load %arg6[%c3_144, %c0_145] : memref<8x32xf32, #tpu.memory_space<vmem>>, vector<1x32xf32>
    tpu.vector_store %arg6[%c3_144, %c0_145], %301 {strides = array<i32>} : memref<8x32xf32, #tpu.memory_space<vmem>>, vector<1x32xf32>,
    %c32_i32_146 = arith.constant 32 : i32
    %303 = arith.addi %0, %c32_i32_146 : i32
    %304 = arith.addi %303, %c3_i32 : i32
    %305 = arith.index_cast %304 : i32 to index
    %306 = memref.load %arg1[%305] : memref<64xi32, #tpu.memory_space<smem>>
    %307 = arith.index_cast %306 : i32 to index
    %c0_147 = arith.constant 0 : index
    %c0_148 = arith.constant 0 : index
    %308 = vector.load %arg2[%307, %c0_147, %c0_148] : memref<6x1x32xf32, #tpu.memory_space<vmem>>, vector<1x1x32xf32>
    %309 = vector.shape_cast %308 : vector<1x1x32xf32> to vector<1x32xf32>
    %c4_149 = arith.constant 4 : index
    %c0_150 = arith.constant 0 : index
    %310 = vector.load %arg6[%c4_149, %c0_150] : memref<8x32xf32, #tpu.memory_space<vmem>>, vector<1x32xf32>
    tpu.vector_store %arg6[%c4_149, %c0_150], %309 {strides = array<i32>} : memref<8x32xf32, #tpu.memory_space<vmem>>, vector<1x32xf32>,
    %c40_i32_151 = arith.constant 40 : i32
    %311 = arith.addi %0, %c40_i32_151 : i32
    %312 = arith.addi %311, %c3_i32 : i32
    %313 = arith.index_cast %312 : i32 to index
    %314 = memref.load %arg1[%313] : memref<64xi32, #tpu.memory_space<smem>>
    %315 = arith.index_cast %314 : i32 to index
    %c0_152 = arith.constant 0 : index
    %c0_153 = arith.constant 0 : index
    %316 = vector.load %arg2[%315, %c0_152, %c0_153] : memref<6x1x32xf32, #tpu.memory_space<vmem>>, vector<1x1x32xf32>
    %317 = vector.shape_cast %316 : vector<1x1x32xf32> to vector<1x32xf32>
    %c5_154 = arith.constant 5 : index
    %c0_155 = arith.constant 0 : index
    %318 = vector.load %arg6[%c5_154, %c0_155] : memref<8x32xf32, #tpu.memory_space<vmem>>, vector<1x32xf32>
    tpu.vector_store %arg6[%c5_154, %c0_155], %317 {strides = array<i32>} : memref<8x32xf32, #tpu.memory_space<vmem>>, vector<1x32xf32>,
    %c48_i32_156 = arith.constant 48 : i32
    %319 = arith.addi %0, %c48_i32_156 : i32
    %320 = arith.addi %319, %c3_i32 : i32
    %321 = arith.index_cast %320 : i32 to index
    %322 = memref.load %arg1[%321] : memref<64xi32, #tpu.memory_space<smem>>
    %323 = arith.index_cast %322 : i32 to index
    %c0_157 = arith.constant 0 : index
    %c0_158 = arith.constant 0 : index
    %324 = vector.load %arg2[%323, %c0_157, %c0_158] : memref<6x1x32xf32, #tpu.memory_space<vmem>>, vector<1x1x32xf32>
    %325 = vector.shape_cast %324 : vector<1x1x32xf32> to vector<1x32xf32>
    %c6_159 = arith.constant 6 : index
    %c0_160 = arith.constant 0 : index
    %326 = vector.load %arg6[%c6_159, %c0_160] : memref<8x32xf32, #tpu.memory_space<vmem>>, vector<1x32xf32>
    tpu.vector_store %arg6[%c6_159, %c0_160], %325 {strides = array<i32>} : memref<8x32xf32, #tpu.memory_space<vmem>>, vector<1x32xf32>,
    %c56_i32_161 = arith.constant 56 : i32
    %327 = arith.addi %0, %c56_i32_161 : i32
    %328 = arith.addi %327, %c3_i32 : i32
    %329 = arith.index_cast %328 : i32 to index
    %330 = memref.load %arg1[%329] : memref<64xi32, #tpu.memory_space<smem>>
    %331 = arith.index_cast %330 : i32 to index
    %c0_162 = arith.constant 0 : index
    %c0_163 = arith.constant 0 : index
    %332 = vector.load %arg2[%331, %c0_162, %c0_163] : memref<6x1x32xf32, #tpu.memory_space<vmem>>, vector<1x1x32xf32>
    %333 = vector.shape_cast %332 : vector<1x1x32xf32> to vector<1x32xf32>
    %c7_164 = arith.constant 7 : index
    %c0_165 = arith.constant 0 : index
    %334 = vector.load %arg6[%c7_164, %c0_165] : memref<8x32xf32, #tpu.memory_space<vmem>>, vector<1x32xf32>
    tpu.vector_store %arg6[%c7_164, %c0_165], %333 {strides = array<i32>} : memref<8x32xf32, #tpu.memory_space<vmem>>, vector<1x32xf32>,
    %c0_166 = arith.constant 0 : index
    %c0_167 = arith.constant 0 : index
    %335 = vector.load %arg6[%c0_166, %c0_167] : memref<8x32xf32, #tpu.memory_space<vmem>>, vector<8x32xf32>
    %336 = arith.index_cast %c3_i32 : i32 to index
    %c0_168 = arith.constant 0 : index
    %c0_169 = arith.constant 0 : index
    %337 = vector.load %arg3[%336, %c0_168, %c0_169] : memref<8x1x32xf32, #tpu.memory_space<vmem>>, vector<1x1x32xf32>
    %338 = vector.shape_cast %337 : vector<1x1x32xf32> to vector<1x32xf32>
    %339 = vector.broadcast %338 : vector<1x32xf32> to vector<8x32xf32>
    %340 = arith.addf %335, %339 : vector<8x32xf32>
    %341 = vector.broadcast %1 : vector<1x32xf32> to vector<8x32xf32>
    %342 = arith.mulf %340, %341 : vector<8x32xf32>
    %cst_170 = arith.constant dense<0.000000e+00> : vector<8xf32>
    %343 = vector.multi_reduction <add>, %342, %cst_170 [1] : vector<8x32xf32> to vector<8xf32>
    %344 = vector.shape_cast %343 : vector<8xf32> to vector<8x1xf32>
    %345 = arith.maximumf %257, %344 : vector<8x1xf32>
    %346 = arith.subf %257, %345 : vector<8x1xf32>
    %347 = math.exp %346 : vector<8x1xf32>
    %348 = arith.subf %344, %345 : vector<8x1xf32>
    %349 = math.exp %348 : vector<8x1xf32>
    %350 = arith.mulf %347, %263 : vector<8x1xf32>
    %351 = arith.addf %350, %349 : vector<8x1xf32>
    %352 = vector.broadcast %347 : vector<8x1xf32> to vector<8x32xf32>
    %353 = arith.mulf %352, %268 : vector<8x32xf32>
    %354 = vector.broadcast %349 : vector<8x1xf32> to vector<8x32xf32>
    %355 = arith.mulf %354, %340 : vector<8x32xf32>
    %356 = arith.addf %353, %355 : vector<8x32xf32>
    %357 = arith.addf %269, %340 : vector<8x32xf32>
    %358 = arith.maximumf %270, %340 : vector<8x32xf32>
    %c4_i32 = arith.constant 4 : i32
    %c0_i32_171 = arith.constant 0 : i32
    %359 = arith.addi %0, %c0_i32_171 : i32
    %360 = arith.addi %359, %c4_i32 : i32
    %361 = arith.index_cast %360 : i32 to index
    %362 = memref.load %arg1[%361] : memref<64xi32, #tpu.memory_space<smem>>
    %363 = arith.index_cast %362 : i32 to index
    %c0_172 = arith.constant 0 : index
    %c0_173 = arith.constant 0 : index
    %364 = vector.load %arg2[%363, %c0_172, %c0_173] : memref<6x1x32xf32, #tpu.memory_space<vmem>>, vector<1x1x32xf32>
    %365 = vector.shape_cast %364 : vector<1x1x32xf32> to vector<1x32xf32>
    %c0_174 = arith.constant 0 : index
    %c0_175 = arith.constant 0 : index
    %366 = vector.load %arg6[%c0_174, %c0_175] : memref<8x32xf32, #tpu.memory_space<vmem>>, vector<1x32xf32>
    tpu.vector_store %arg6[%c0_174, %c0_175], %365 {strides = array<i32>} : memref<8x32xf32, #tpu.memory_space<vmem>>, vector<1x32xf32>,
    %c8_i32_176 = arith.constant 8 : i32
    %367 = arith.addi %0, %c8_i32_176 : i32
    %368 = arith.addi %367, %c4_i32 : i32
    %369 = arith.index_cast %368 : i32 to index
    %370 = memref.load %arg1[%369] : memref<64xi32, #tpu.memory_space<smem>>
    %371 = arith.index_cast %370 : i32 to index
    %c0_177 = arith.constant 0 : index
    %c0_178 = arith.constant 0 : index
    %372 = vector.load %arg2[%371, %c0_177, %c0_178] : memref<6x1x32xf32, #tpu.memory_space<vmem>>, vector<1x1x32xf32>
    %373 = vector.shape_cast %372 : vector<1x1x32xf32> to vector<1x32xf32>
    %c1_179 = arith.constant 1 : index
    %c0_180 = arith.constant 0 : index
    %374 = vector.load %arg6[%c1_179, %c0_180] : memref<8x32xf32, #tpu.memory_space<vmem>>, vector<1x32xf32>
    tpu.vector_store %arg6[%c1_179, %c0_180], %373 {strides = array<i32>} : memref<8x32xf32, #tpu.memory_space<vmem>>, vector<1x32xf32>,
    %c16_i32_181 = arith.constant 16 : i32
    %375 = arith.addi %0, %c16_i32_181 : i32
    %376 = arith.addi %375, %c4_i32 : i32
    %377 = arith.index_cast %376 : i32 to index
    %378 = memref.load %arg1[%377] : memref<64xi32, #tpu.memory_space<smem>>
    %379 = arith.index_cast %378 : i32 to index
    %c0_182 = arith.constant 0 : index
    %c0_183 = arith.constant 0 : index
    %380 = vector.load %arg2[%379, %c0_182, %c0_183] : memref<6x1x32xf32, #tpu.memory_space<vmem>>, vector<1x1x32xf32>
    %381 = vector.shape_cast %380 : vector<1x1x32xf32> to vector<1x32xf32>
    %c2_184 = arith.constant 2 : index
    %c0_185 = arith.constant 0 : index
    %382 = vector.load %arg6[%c2_184, %c0_185] : memref<8x32xf32, #tpu.memory_space<vmem>>, vector<1x32xf32>
    tpu.vector_store %arg6[%c2_184, %c0_185], %381 {strides = array<i32>} : memref<8x32xf32, #tpu.memory_space<vmem>>, vector<1x32xf32>,
    %c24_i32_186 = arith.constant 24 : i32
    %383 = arith.addi %0, %c24_i32_186 : i32
    %384 = arith.addi %383, %c4_i32 : i32
    %385 = arith.index_cast %384 : i32 to index
    %386 = memref.load %arg1[%385] : memref<64xi32, #tpu.memory_space<smem>>
    %387 = arith.index_cast %386 : i32 to index
    %c0_187 = arith.constant 0 : index
    %c0_188 = arith.constant 0 : index
    %388 = vector.load %arg2[%387, %c0_187, %c0_188] : memref<6x1x32xf32, #tpu.memory_space<vmem>>, vector<1x1x32xf32>
    %389 = vector.shape_cast %388 : vector<1x1x32xf32> to vector<1x32xf32>
    %c3_189 = arith.constant 3 : index
    %c0_190 = arith.constant 0 : index
    %390 = vector.load %arg6[%c3_189, %c0_190] : memref<8x32xf32, #tpu.memory_space<vmem>>, vector<1x32xf32>
    tpu.vector_store %arg6[%c3_189, %c0_190], %389 {strides = array<i32>} : memref<8x32xf32, #tpu.memory_space<vmem>>, vector<1x32xf32>,
    %c32_i32_191 = arith.constant 32 : i32
    %391 = arith.addi %0, %c32_i32_191 : i32
    %392 = arith.addi %391, %c4_i32 : i32
    %393 = arith.index_cast %392 : i32 to index
    %394 = memref.load %arg1[%393] : memref<64xi32, #tpu.memory_space<smem>>
    %395 = arith.index_cast %394 : i32 to index
    %c0_192 = arith.constant 0 : index
    %c0_193 = arith.constant 0 : index
    %396 = vector.load %arg2[%395, %c0_192, %c0_193] : memref<6x1x32xf32, #tpu.memory_space<vmem>>, vector<1x1x32xf32>
    %397 = vector.shape_cast %396 : vector<1x1x32xf32> to vector<1x32xf32>
    %c4_194 = arith.constant 4 : index
    %c0_195 = arith.constant 0 : index
    %398 = vector.load %arg6[%c4_194, %c0_195] : memref<8x32xf32, #tpu.memory_space<vmem>>, vector<1x32xf32>
    tpu.vector_store %arg6[%c4_194, %c0_195], %397 {strides = array<i32>} : memref<8x32xf32, #tpu.memory_space<vmem>>, vector<1x32xf32>,
    %c40_i32_196 = arith.constant 40 : i32
    %399 = arith.addi %0, %c40_i32_196 : i32
    %400 = arith.addi %399, %c4_i32 : i32
    %401 = arith.index_cast %400 : i32 to index
    %402 = memref.load %arg1[%401] : memref<64xi32, #tpu.memory_space<smem>>
    %403 = arith.index_cast %402 : i32 to index
    %c0_197 = arith.constant 0 : index
    %c0_198 = arith.constant 0 : index
    %404 = vector.load %arg2[%403, %c0_197, %c0_198] : memref<6x1x32xf32, #tpu.memory_space<vmem>>, vector<1x1x32xf32>
    %405 = vector.shape_cast %404 : vector<1x1x32xf32> to vector<1x32xf32>
    %c5_199 = arith.constant 5 : index
    %c0_200 = arith.constant 0 : index
    %406 = vector.load %arg6[%c5_199, %c0_200] : memref<8x32xf32, #tpu.memory_space<vmem>>, vector<1x32xf32>
    tpu.vector_store %arg6[%c5_199, %c0_200], %405 {strides = array<i32>} : memref<8x32xf32, #tpu.memory_space<vmem>>, vector<1x32xf32>,
    %c48_i32_201 = arith.constant 48 : i32
    %407 = arith.addi %0, %c48_i32_201 : i32
    %408 = arith.addi %407, %c4_i32 : i32
    %409 = arith.index_cast %408 : i32 to index
    %410 = memref.load %arg1[%409] : memref<64xi32, #tpu.memory_space<smem>>
    %411 = arith.index_cast %410 : i32 to index
    %c0_202 = arith.constant 0 : index
    %c0_203 = arith.constant 0 : index
    %412 = vector.load %arg2[%411, %c0_202, %c0_203] : memref<6x1x32xf32, #tpu.memory_space<vmem>>, vector<1x1x32xf32>
    %413 = vector.shape_cast %412 : vector<1x1x32xf32> to vector<1x32xf32>
    %c6_204 = arith.constant 6 : index
    %c0_205 = arith.constant 0 : index
    %414 = vector.load %arg6[%c6_204, %c0_205] : memref<8x32xf32, #tpu.memory_space<vmem>>, vector<1x32xf32>
    tpu.vector_store %arg6[%c6_204, %c0_205], %413 {strides = array<i32>} : memref<8x32xf32, #tpu.memory_space<vmem>>, vector<1x32xf32>,
    %c56_i32_206 = arith.constant 56 : i32
    %415 = arith.addi %0, %c56_i32_206 : i32
    %416 = arith.addi %415, %c4_i32 : i32
    %417 = arith.index_cast %416 : i32 to index
    %418 = memref.load %arg1[%417] : memref<64xi32, #tpu.memory_space<smem>>
    %419 = arith.index_cast %418 : i32 to index
    %c0_207 = arith.constant 0 : index
    %c0_208 = arith.constant 0 : index
    %420 = vector.load %arg2[%419, %c0_207, %c0_208] : memref<6x1x32xf32, #tpu.memory_space<vmem>>, vector<1x1x32xf32>
    %421 = vector.shape_cast %420 : vector<1x1x32xf32> to vector<1x32xf32>
    %c7_209 = arith.constant 7 : index
    %c0_210 = arith.constant 0 : index
    %422 = vector.load %arg6[%c7_209, %c0_210] : memref<8x32xf32, #tpu.memory_space<vmem>>, vector<1x32xf32>
    tpu.vector_store %arg6[%c7_209, %c0_210], %421 {strides = array<i32>} : memref<8x32xf32, #tpu.memory_space<vmem>>, vector<1x32xf32>,
    %c0_211 = arith.constant 0 : index
    %c0_212 = arith.constant 0 : index
    %423 = vector.load %arg6[%c0_211, %c0_212] : memref<8x32xf32, #tpu.memory_space<vmem>>, vector<8x32xf32>
    %424 = arith.index_cast %c4_i32 : i32 to index
    %c0_213 = arith.constant 0 : index
    %c0_214 = arith.constant 0 : index
    %425 = vector.load %arg3[%424, %c0_213, %c0_214] : memref<8x1x32xf32, #tpu.memory_space<vmem>>, vector<1x1x32xf32>
    %426 = vector.shape_cast %425 : vector<1x1x32xf32> to vector<1x32xf32>
    %427 = vector.broadcast %426 : vector<1x32xf32> to vector<8x32xf32>
    %428 = arith.addf %423, %427 : vector<8x32xf32>
    %429 = vector.broadcast %1 : vector<1x32xf32> to vector<8x32xf32>
    %430 = arith.mulf %428, %429 : vector<8x32xf32>
    %cst_215 = arith.constant dense<0.000000e+00> : vector<8xf32>
    %431 = vector.multi_reduction <add>, %430, %cst_215 [1] : vector<8x32xf32> to vector<8xf32>
    %432 = vector.shape_cast %431 : vector<8xf32> to vector<8x1xf32>
    %433 = arith.maximumf %345, %432 : vector<8x1xf32>
    %434 = arith.subf %345, %433 : vector<8x1xf32>
    %435 = math.exp %434 : vector<8x1xf32>
    %436 = arith.subf %432, %433 : vector<8x1xf32>
    %437 = math.exp %436 : vector<8x1xf32>
    %438 = arith.mulf %435, %351 : vector<8x1xf32>
    %439 = arith.addf %438, %437 : vector<8x1xf32>
    %440 = vector.broadcast %435 : vector<8x1xf32> to vector<8x32xf32>
    %441 = arith.mulf %440, %356 : vector<8x32xf32>
    %442 = vector.broadcast %437 : vector<8x1xf32> to vector<8x32xf32>
    %443 = arith.mulf %442, %428 : vector<8x32xf32>
    %444 = arith.addf %441, %443 : vector<8x32xf32>
    %445 = arith.addf %357, %428 : vector<8x32xf32>
    %446 = arith.maximumf %358, %428 : vector<8x32xf32>
    %c5_i32 = arith.constant 5 : i32
    %c0_i32_216 = arith.constant 0 : i32
    %447 = arith.addi %0, %c0_i32_216 : i32
    %448 = arith.addi %447, %c5_i32 : i32
    %449 = arith.index_cast %448 : i32 to index
    %450 = memref.load %arg1[%449] : memref<64xi32, #tpu.memory_space<smem>>
    %451 = arith.index_cast %450 : i32 to index
    %c0_217 = arith.constant 0 : index
    %c0_218 = arith.constant 0 : index
    %452 = vector.load %arg2[%451, %c0_217, %c0_218] : memref<6x1x32xf32, #tpu.memory_space<vmem>>, vector<1x1x32xf32>
    %453 = vector.shape_cast %452 : vector<1x1x32xf32> to vector<1x32xf32>
    %c0_219 = arith.constant 0 : index
    %c0_220 = arith.constant 0 : index
    %454 = vector.load %arg6[%c0_219, %c0_220] : memref<8x32xf32, #tpu.memory_space<vmem>>, vector<1x32xf32>
    tpu.vector_store %arg6[%c0_219, %c0_220], %453 {strides = array<i32>} : memref<8x32xf32, #tpu.memory_space<vmem>>, vector<1x32xf32>,
    %c8_i32_221 = arith.constant 8 : i32
    %455 = arith.addi %0, %c8_i32_221 : i32
    %456 = arith.addi %455, %c5_i32 : i32
    %457 = arith.index_cast %456 : i32 to index
    %458 = memref.load %arg1[%457] : memref<64xi32, #tpu.memory_space<smem>>
    %459 = arith.index_cast %458 : i32 to index
    %c0_222 = arith.constant 0 : index
    %c0_223 = arith.constant 0 : index
    %460 = vector.load %arg2[%459, %c0_222, %c0_223] : memref<6x1x32xf32, #tpu.memory_space<vmem>>, vector<1x1x32xf32>
    %461 = vector.shape_cast %460 : vector<1x1x32xf32> to vector<1x32xf32>
    %c1_224 = arith.constant 1 : index
    %c0_225 = arith.constant 0 : index
    %462 = vector.load %arg6[%c1_224, %c0_225] : memref<8x32xf32, #tpu.memory_space<vmem>>, vector<1x32xf32>
    tpu.vector_store %arg6[%c1_224, %c0_225], %461 {strides = array<i32>} : memref<8x32xf32, #tpu.memory_space<vmem>>, vector<1x32xf32>,
    %c16_i32_226 = arith.constant 16 : i32
    %463 = arith.addi %0, %c16_i32_226 : i32
    %464 = arith.addi %463, %c5_i32 : i32
    %465 = arith.index_cast %464 : i32 to index
    %466 = memref.load %arg1[%465] : memref<64xi32, #tpu.memory_space<smem>>
    %467 = arith.index_cast %466 : i32 to index
    %c0_227 = arith.constant 0 : index
    %c0_228 = arith.constant 0 : index
    %468 = vector.load %arg2[%467, %c0_227, %c0_228] : memref<6x1x32xf32, #tpu.memory_space<vmem>>, vector<1x1x32xf32>
    %469 = vector.shape_cast %468 : vector<1x1x32xf32> to vector<1x32xf32>
    %c2_229 = arith.constant 2 : index
    %c0_230 = arith.constant 0 : index
    %470 = vector.load %arg6[%c2_229, %c0_230] : memref<8x32xf32, #tpu.memory_space<vmem>>, vector<1x32xf32>
    tpu.vector_store %arg6[%c2_229, %c0_230], %469 {strides = array<i32>} : memref<8x32xf32, #tpu.memory_space<vmem>>, vector<1x32xf32>,
    %c24_i32_231 = arith.constant 24 : i32
    %471 = arith.addi %0, %c24_i32_231 : i32
    %472 = arith.addi %471, %c5_i32 : i32
    %473 = arith.index_cast %472 : i32 to index
    %474 = memref.load %arg1[%473] : memref<64xi32, #tpu.memory_space<smem>>
    %475 = arith.index_cast %474 : i32 to index
    %c0_232 = arith.constant 0 : index
    %c0_233 = arith.constant 0 : index
    %476 = vector.load %arg2[%475, %c0_232, %c0_233] : memref<6x1x32xf32, #tpu.memory_space<vmem>>, vector<1x1x32xf32>
    %477 = vector.shape_cast %476 : vector<1x1x32xf32> to vector<1x32xf32>
    %c3_234 = arith.constant 3 : index
    %c0_235 = arith.constant 0 : index
    %478 = vector.load %arg6[%c3_234, %c0_235] : memref<8x32xf32, #tpu.memory_space<vmem>>, vector<1x32xf32>
    tpu.vector_store %arg6[%c3_234, %c0_235], %477 {strides = array<i32>} : memref<8x32xf32, #tpu.memory_space<vmem>>, vector<1x32xf32>,
    %c32_i32_236 = arith.constant 32 : i32
    %479 = arith.addi %0, %c32_i32_236 : i32
    %480 = arith.addi %479, %c5_i32 : i32
    %481 = arith.index_cast %480 : i32 to index
    %482 = memref.load %arg1[%481] : memref<64xi32, #tpu.memory_space<smem>>
    %483 = arith.index_cast %482 : i32 to index
    %c0_237 = arith.constant 0 : index
    %c0_238 = arith.constant 0 : index
    %484 = vector.load %arg2[%483, %c0_237, %c0_238] : memref<6x1x32xf32, #tpu.memory_space<vmem>>, vector<1x1x32xf32>
    %485 = vector.shape_cast %484 : vector<1x1x32xf32> to vector<1x32xf32>
    %c4_239 = arith.constant 4 : index
    %c0_240 = arith.constant 0 : index
    %486 = vector.load %arg6[%c4_239, %c0_240] : memref<8x32xf32, #tpu.memory_space<vmem>>, vector<1x32xf32>
    tpu.vector_store %arg6[%c4_239, %c0_240], %485 {strides = array<i32>} : memref<8x32xf32, #tpu.memory_space<vmem>>, vector<1x32xf32>,
    %c40_i32_241 = arith.constant 40 : i32
    %487 = arith.addi %0, %c40_i32_241 : i32
    %488 = arith.addi %487, %c5_i32 : i32
    %489 = arith.index_cast %488 : i32 to index
    %490 = memref.load %arg1[%489] : memref<64xi32, #tpu.memory_space<smem>>
    %491 = arith.index_cast %490 : i32 to index
    %c0_242 = arith.constant 0 : index
    %c0_243 = arith.constant 0 : index
    %492 = vector.load %arg2[%491, %c0_242, %c0_243] : memref<6x1x32xf32, #tpu.memory_space<vmem>>, vector<1x1x32xf32>
    %493 = vector.shape_cast %492 : vector<1x1x32xf32> to vector<1x32xf32>
    %c5_244 = arith.constant 5 : index
    %c0_245 = arith.constant 0 : index
    %494 = vector.load %arg6[%c5_244, %c0_245] : memref<8x32xf32, #tpu.memory_space<vmem>>, vector<1x32xf32>
    tpu.vector_store %arg6[%c5_244, %c0_245], %493 {strides = array<i32>} : memref<8x32xf32, #tpu.memory_space<vmem>>, vector<1x32xf32>,
    %c48_i32_246 = arith.constant 48 : i32
    %495 = arith.addi %0, %c48_i32_246 : i32
    %496 = arith.addi %495, %c5_i32 : i32
    %497 = arith.index_cast %496 : i32 to index
    %498 = memref.load %arg1[%497] : memref<64xi32, #tpu.memory_space<smem>>
    %499 = arith.index_cast %498 : i32 to index
    %c0_247 = arith.constant 0 : index
    %c0_248 = arith.constant 0 : index
    %500 = vector.load %arg2[%499, %c0_247, %c0_248] : memref<6x1x32xf32, #tpu.memory_space<vmem>>, vector<1x1x32xf32>
    %501 = vector.shape_cast %500 : vector<1x1x32xf32> to vector<1x32xf32>
    %c6_249 = arith.constant 6 : index
    %c0_250 = arith.constant 0 : index
    %502 = vector.load %arg6[%c6_249, %c0_250] : memref<8x32xf32, #tpu.memory_space<vmem>>, vector<1x32xf32>
    tpu.vector_store %arg6[%c6_249, %c0_250], %501 {strides = array<i32>} : memref<8x32xf32, #tpu.memory_space<vmem>>, vector<1x32xf32>,
    %c56_i32_251 = arith.constant 56 : i32
    %503 = arith.addi %0, %c56_i32_251 : i32
    %504 = arith.addi %503, %c5_i32 : i32
    %505 = arith.index_cast %504 : i32 to index
    %506 = memref.load %arg1[%505] : memref<64xi32, #tpu.memory_space<smem>>
    %507 = arith.index_cast %506 : i32 to index
    %c0_252 = arith.constant 0 : index
    %c0_253 = arith.constant 0 : index
    %508 = vector.load %arg2[%507, %c0_252, %c0_253] : memref<6x1x32xf32, #tpu.memory_space<vmem>>, vector<1x1x32xf32>
    %509 = vector.shape_cast %508 : vector<1x1x32xf32> to vector<1x32xf32>
    %c7_254 = arith.constant 7 : index
    %c0_255 = arith.constant 0 : index
    %510 = vector.load %arg6[%c7_254, %c0_255] : memref<8x32xf32, #tpu.memory_space<vmem>>, vector<1x32xf32>
    tpu.vector_store %arg6[%c7_254, %c0_255], %509 {strides = array<i32>} : memref<8x32xf32, #tpu.memory_space<vmem>>, vector<1x32xf32>,
    %c0_256 = arith.constant 0 : index
    %c0_257 = arith.constant 0 : index
    %511 = vector.load %arg6[%c0_256, %c0_257] : memref<8x32xf32, #tpu.memory_space<vmem>>, vector<8x32xf32>
    %512 = arith.index_cast %c5_i32 : i32 to index
    %c0_258 = arith.constant 0 : index
    %c0_259 = arith.constant 0 : index
    %513 = vector.load %arg3[%512, %c0_258, %c0_259] : memref<8x1x32xf32, #tpu.memory_space<vmem>>, vector<1x1x32xf32>
    %514 = vector.shape_cast %513 : vector<1x1x32xf32> to vector<1x32xf32>
    %515 = vector.broadcast %514 : vector<1x32xf32> to vector<8x32xf32>
    %516 = arith.addf %511, %515 : vector<8x32xf32>
    %517 = vector.broadcast %1 : vector<1x32xf32> to vector<8x32xf32>
    %518 = arith.mulf %516, %517 : vector<8x32xf32>
    %cst_260 = arith.constant dense<0.000000e+00> : vector<8xf32>
    %519 = vector.multi_reduction <add>, %518, %cst_260 [1] : vector<8x32xf32> to vector<8xf32>
    %520 = vector.shape_cast %519 : vector<8xf32> to vector<8x1xf32>
    %521 = arith.maximumf %433, %520 : vector<8x1xf32>
    %522 = arith.subf %433, %521 : vector<8x1xf32>
    %523 = math.exp %522 : vector<8x1xf32>
    %524 = arith.subf %520, %521 : vector<8x1xf32>
    %525 = math.exp %524 : vector<8x1xf32>
    %526 = arith.mulf %523, %439 : vector<8x1xf32>
    %527 = arith.addf %526, %525 : vector<8x1xf32>
    %528 = vector.broadcast %523 : vector<8x1xf32> to vector<8x32xf32>
    %529 = arith.mulf %528, %444 : vector<8x32xf32>
    %530 = vector.broadcast %525 : vector<8x1xf32> to vector<8x32xf32>
    %531 = arith.mulf %530, %516 : vector<8x32xf32>
    %532 = arith.addf %529, %531 : vector<8x32xf32>
    %533 = arith.addf %445, %516 : vector<8x32xf32>
    %534 = arith.maximumf %446, %516 : vector<8x32xf32>
    %c6_i32 = arith.constant 6 : i32
    %c0_i32_261 = arith.constant 0 : i32
    %535 = arith.addi %0, %c0_i32_261 : i32
    %536 = arith.addi %535, %c6_i32 : i32
    %537 = arith.index_cast %536 : i32 to index
    %538 = memref.load %arg1[%537] : memref<64xi32, #tpu.memory_space<smem>>
    %539 = arith.index_cast %538 : i32 to index
    %c0_262 = arith.constant 0 : index
    %c0_263 = arith.constant 0 : index
    %540 = vector.load %arg2[%539, %c0_262, %c0_263] : memref<6x1x32xf32, #tpu.memory_space<vmem>>, vector<1x1x32xf32>
    %541 = vector.shape_cast %540 : vector<1x1x32xf32> to vector<1x32xf32>
    %c0_264 = arith.constant 0 : index
    %c0_265 = arith.constant 0 : index
    %542 = vector.load %arg6[%c0_264, %c0_265] : memref<8x32xf32, #tpu.memory_space<vmem>>, vector<1x32xf32>
    tpu.vector_store %arg6[%c0_264, %c0_265], %541 {strides = array<i32>} : memref<8x32xf32, #tpu.memory_space<vmem>>, vector<1x32xf32>,
    %c8_i32_266 = arith.constant 8 : i32
    %543 = arith.addi %0, %c8_i32_266 : i32
    %544 = arith.addi %543, %c6_i32 : i32
    %545 = arith.index_cast %544 : i32 to index
    %546 = memref.load %arg1[%545] : memref<64xi32, #tpu.memory_space<smem>>
    %547 = arith.index_cast %546 : i32 to index
    %c0_267 = arith.constant 0 : index
    %c0_268 = arith.constant 0 : index
    %548 = vector.load %arg2[%547, %c0_267, %c0_268] : memref<6x1x32xf32, #tpu.memory_space<vmem>>, vector<1x1x32xf32>
    %549 = vector.shape_cast %548 : vector<1x1x32xf32> to vector<1x32xf32>
    %c1_269 = arith.constant 1 : index
    %c0_270 = arith.constant 0 : index
    %550 = vector.load %arg6[%c1_269, %c0_270] : memref<8x32xf32, #tpu.memory_space<vmem>>, vector<1x32xf32>
    tpu.vector_store %arg6[%c1_269, %c0_270], %549 {strides = array<i32>} : memref<8x32xf32, #tpu.memory_space<vmem>>, vector<1x32xf32>,
    %c16_i32_271 = arith.constant 16 : i32
    %551 = arith.addi %0, %c16_i32_271 : i32
    %552 = arith.addi %551, %c6_i32 : i32
    %553 = arith.index_cast %552 : i32 to index
    %554 = memref.load %arg1[%553] : memref<64xi32, #tpu.memory_space<smem>>
    %555 = arith.index_cast %554 : i32 to index
    %c0_272 = arith.constant 0 : index
    %c0_273 = arith.constant 0 : index
    %556 = vector.load %arg2[%555, %c0_272, %c0_273] : memref<6x1x32xf32, #tpu.memory_space<vmem>>, vector<1x1x32xf32>
    %557 = vector.shape_cast %556 : vector<1x1x32xf32> to vector<1x32xf32>
    %c2_274 = arith.constant 2 : index
    %c0_275 = arith.constant 0 : index
    %558 = vector.load %arg6[%c2_274, %c0_275] : memref<8x32xf32, #tpu.memory_space<vmem>>, vector<1x32xf32>
    tpu.vector_store %arg6[%c2_274, %c0_275], %557 {strides = array<i32>} : memref<8x32xf32, #tpu.memory_space<vmem>>, vector<1x32xf32>,
    %c24_i32_276 = arith.constant 24 : i32
    %559 = arith.addi %0, %c24_i32_276 : i32
    %560 = arith.addi %559, %c6_i32 : i32
    %561 = arith.index_cast %560 : i32 to index
    %562 = memref.load %arg1[%561] : memref<64xi32, #tpu.memory_space<smem>>
    %563 = arith.index_cast %562 : i32 to index
    %c0_277 = arith.constant 0 : index
    %c0_278 = arith.constant 0 : index
    %564 = vector.load %arg2[%563, %c0_277, %c0_278] : memref<6x1x32xf32, #tpu.memory_space<vmem>>, vector<1x1x32xf32>
    %565 = vector.shape_cast %564 : vector<1x1x32xf32> to vector<1x32xf32>
    %c3_279 = arith.constant 3 : index
    %c0_280 = arith.constant 0 : index
    %566 = vector.load %arg6[%c3_279, %c0_280] : memref<8x32xf32, #tpu.memory_space<vmem>>, vector<1x32xf32>
    tpu.vector_store %arg6[%c3_279, %c0_280], %565 {strides = array<i32>} : memref<8x32xf32, #tpu.memory_space<vmem>>, vector<1x32xf32>,
    %c32_i32_281 = arith.constant 32 : i32
    %567 = arith.addi %0, %c32_i32_281 : i32
    %568 = arith.addi %567, %c6_i32 : i32
    %569 = arith.index_cast %568 : i32 to index
    %570 = memref.load %arg1[%569] : memref<64xi32, #tpu.memory_space<smem>>
    %571 = arith.index_cast %570 : i32 to index
    %c0_282 = arith.constant 0 : index
    %c0_283 = arith.constant 0 : index
    %572 = vector.load %arg2[%571, %c0_282, %c0_283] : memref<6x1x32xf32, #tpu.memory_space<vmem>>, vector<1x1x32xf32>
    %573 = vector.shape_cast %572 : vector<1x1x32xf32> to vector<1x32xf32>
    %c4_284 = arith.constant 4 : index
    %c0_285 = arith.constant 0 : index
    %574 = vector.load %arg6[%c4_284, %c0_285] : memref<8x32xf32, #tpu.memory_space<vmem>>, vector<1x32xf32>
    tpu.vector_store %arg6[%c4_284, %c0_285], %573 {strides = array<i32>} : memref<8x32xf32, #tpu.memory_space<vmem>>, vector<1x32xf32>,
    %c40_i32_286 = arith.constant 40 : i32
    %575 = arith.addi %0, %c40_i32_286 : i32
    %576 = arith.addi %575, %c6_i32 : i32
    %577 = arith.index_cast %576 : i32 to index
    %578 = memref.load %arg1[%577] : memref<64xi32, #tpu.memory_space<smem>>
    %579 = arith.index_cast %578 : i32 to index
    %c0_287 = arith.constant 0 : index
    %c0_288 = arith.constant 0 : index
    %580 = vector.load %arg2[%579, %c0_287, %c0_288] : memref<6x1x32xf32, #tpu.memory_space<vmem>>, vector<1x1x32xf32>
    %581 = vector.shape_cast %580 : vector<1x1x32xf32> to vector<1x32xf32>
    %c5_289 = arith.constant 5 : index
    %c0_290 = arith.constant 0 : index
    %582 = vector.load %arg6[%c5_289, %c0_290] : memref<8x32xf32, #tpu.memory_space<vmem>>, vector<1x32xf32>
    tpu.vector_store %arg6[%c5_289, %c0_290], %581 {strides = array<i32>} : memref<8x32xf32, #tpu.memory_space<vmem>>, vector<1x32xf32>,
    %c48_i32_291 = arith.constant 48 : i32
    %583 = arith.addi %0, %c48_i32_291 : i32
    %584 = arith.addi %583, %c6_i32 : i32
    %585 = arith.index_cast %584 : i32 to index
    %586 = memref.load %arg1[%585] : memref<64xi32, #tpu.memory_space<smem>>
    %587 = arith.index_cast %586 : i32 to index
    %c0_292 = arith.constant 0 : index
    %c0_293 = arith.constant 0 : index
    %588 = vector.load %arg2[%587, %c0_292, %c0_293] : memref<6x1x32xf32, #tpu.memory_space<vmem>>, vector<1x1x32xf32>
    %589 = vector.shape_cast %588 : vector<1x1x32xf32> to vector<1x32xf32>
    %c6_294 = arith.constant 6 : index
    %c0_295 = arith.constant 0 : index
    %590 = vector.load %arg6[%c6_294, %c0_295] : memref<8x32xf32, #tpu.memory_space<vmem>>, vector<1x32xf32>
    tpu.vector_store %arg6[%c6_294, %c0_295], %589 {strides = array<i32>} : memref<8x32xf32, #tpu.memory_space<vmem>>, vector<1x32xf32>,
    %c56_i32_296 = arith.constant 56 : i32
    %591 = arith.addi %0, %c56_i32_296 : i32
    %592 = arith.addi %591, %c6_i32 : i32
    %593 = arith.index_cast %592 : i32 to index
    %594 = memref.load %arg1[%593] : memref<64xi32, #tpu.memory_space<smem>>
    %595 = arith.index_cast %594 : i32 to index
    %c0_297 = arith.constant 0 : index
    %c0_298 = arith.constant 0 : index
    %596 = vector.load %arg2[%595, %c0_297, %c0_298] : memref<6x1x32xf32, #tpu.memory_space<vmem>>, vector<1x1x32xf32>
    %597 = vector.shape_cast %596 : vector<1x1x32xf32> to vector<1x32xf32>
    %c7_299 = arith.constant 7 : index
    %c0_300 = arith.constant 0 : index
    %598 = vector.load %arg6[%c7_299, %c0_300] : memref<8x32xf32, #tpu.memory_space<vmem>>, vector<1x32xf32>
    tpu.vector_store %arg6[%c7_299, %c0_300], %597 {strides = array<i32>} : memref<8x32xf32, #tpu.memory_space<vmem>>, vector<1x32xf32>,
    %c0_301 = arith.constant 0 : index
    %c0_302 = arith.constant 0 : index
    %599 = vector.load %arg6[%c0_301, %c0_302] : memref<8x32xf32, #tpu.memory_space<vmem>>, vector<8x32xf32>
    %600 = arith.index_cast %c6_i32 : i32 to index
    %c0_303 = arith.constant 0 : index
    %c0_304 = arith.constant 0 : index
    %601 = vector.load %arg3[%600, %c0_303, %c0_304] : memref<8x1x32xf32, #tpu.memory_space<vmem>>, vector<1x1x32xf32>
    %602 = vector.shape_cast %601 : vector<1x1x32xf32> to vector<1x32xf32>
    %603 = vector.broadcast %602 : vector<1x32xf32> to vector<8x32xf32>
    %604 = arith.addf %599, %603 : vector<8x32xf32>
    %605 = vector.broadcast %1 : vector<1x32xf32> to vector<8x32xf32>
    %606 = arith.mulf %604, %605 : vector<8x32xf32>
    %cst_305 = arith.constant dense<0.000000e+00> : vector<8xf32>
    %607 = vector.multi_reduction <add>, %606, %cst_305 [1] : vector<8x32xf32> to vector<8xf32>
    %608 = vector.shape_cast %607 : vector<8xf32> to vector<8x1xf32>
    %609 = arith.maximumf %521, %608 : vector<8x1xf32>
    %610 = arith.subf %521, %609 : vector<8x1xf32>
    %611 = math.exp %610 : vector<8x1xf32>
    %612 = arith.subf %608, %609 : vector<8x1xf32>
    %613 = math.exp %612 : vector<8x1xf32>
    %614 = arith.mulf %611, %527 : vector<8x1xf32>
    %615 = arith.addf %614, %613 : vector<8x1xf32>
    %616 = vector.broadcast %611 : vector<8x1xf32> to vector<8x32xf32>
    %617 = arith.mulf %616, %532 : vector<8x32xf32>
    %618 = vector.broadcast %613 : vector<8x1xf32> to vector<8x32xf32>
    %619 = arith.mulf %618, %604 : vector<8x32xf32>
    %620 = arith.addf %617, %619 : vector<8x32xf32>
    %621 = arith.addf %533, %604 : vector<8x32xf32>
    %622 = arith.maximumf %534, %604 : vector<8x32xf32>
    %c7_i32 = arith.constant 7 : i32
    %c0_i32_306 = arith.constant 0 : i32
    %623 = arith.addi %0, %c0_i32_306 : i32
    %624 = arith.addi %623, %c7_i32 : i32
    %625 = arith.index_cast %624 : i32 to index
    %626 = memref.load %arg1[%625] : memref<64xi32, #tpu.memory_space<smem>>
    %627 = arith.index_cast %626 : i32 to index
    %c0_307 = arith.constant 0 : index
    %c0_308 = arith.constant 0 : index
    %628 = vector.load %arg2[%627, %c0_307, %c0_308] : memref<6x1x32xf32, #tpu.memory_space<vmem>>, vector<1x1x32xf32>
    %629 = vector.shape_cast %628 : vector<1x1x32xf32> to vector<1x32xf32>
    %c0_309 = arith.constant 0 : index
    %c0_310 = arith.constant 0 : index
    %630 = vector.load %arg6[%c0_309, %c0_310] : memref<8x32xf32, #tpu.memory_space<vmem>>, vector<1x32xf32>
    tpu.vector_store %arg6[%c0_309, %c0_310], %629 {strides = array<i32>} : memref<8x32xf32, #tpu.memory_space<vmem>>, vector<1x32xf32>,
    %c8_i32_311 = arith.constant 8 : i32
    %631 = arith.addi %0, %c8_i32_311 : i32
    %632 = arith.addi %631, %c7_i32 : i32
    %633 = arith.index_cast %632 : i32 to index
    %634 = memref.load %arg1[%633] : memref<64xi32, #tpu.memory_space<smem>>
    %635 = arith.index_cast %634 : i32 to index
    %c0_312 = arith.constant 0 : index
    %c0_313 = arith.constant 0 : index
    %636 = vector.load %arg2[%635, %c0_312, %c0_313] : memref<6x1x32xf32, #tpu.memory_space<vmem>>, vector<1x1x32xf32>
    %637 = vector.shape_cast %636 : vector<1x1x32xf32> to vector<1x32xf32>
    %c1_314 = arith.constant 1 : index
    %c0_315 = arith.constant 0 : index
    %638 = vector.load %arg6[%c1_314, %c0_315] : memref<8x32xf32, #tpu.memory_space<vmem>>, vector<1x32xf32>
    tpu.vector_store %arg6[%c1_314, %c0_315], %637 {strides = array<i32>} : memref<8x32xf32, #tpu.memory_space<vmem>>, vector<1x32xf32>,
    %c16_i32_316 = arith.constant 16 : i32
    %639 = arith.addi %0, %c16_i32_316 : i32
    %640 = arith.addi %639, %c7_i32 : i32
    %641 = arith.index_cast %640 : i32 to index
    %642 = memref.load %arg1[%641] : memref<64xi32, #tpu.memory_space<smem>>
    %643 = arith.index_cast %642 : i32 to index
    %c0_317 = arith.constant 0 : index
    %c0_318 = arith.constant 0 : index
    %644 = vector.load %arg2[%643, %c0_317, %c0_318] : memref<6x1x32xf32, #tpu.memory_space<vmem>>, vector<1x1x32xf32>
    %645 = vector.shape_cast %644 : vector<1x1x32xf32> to vector<1x32xf32>
    %c2_319 = arith.constant 2 : index
    %c0_320 = arith.constant 0 : index
    %646 = vector.load %arg6[%c2_319, %c0_320] : memref<8x32xf32, #tpu.memory_space<vmem>>, vector<1x32xf32>
    tpu.vector_store %arg6[%c2_319, %c0_320], %645 {strides = array<i32>} : memref<8x32xf32, #tpu.memory_space<vmem>>, vector<1x32xf32>,
    %c24_i32_321 = arith.constant 24 : i32
    %647 = arith.addi %0, %c24_i32_321 : i32
    %648 = arith.addi %647, %c7_i32 : i32
    %649 = arith.index_cast %648 : i32 to index
    %650 = memref.load %arg1[%649] : memref<64xi32, #tpu.memory_space<smem>>
    %651 = arith.index_cast %650 : i32 to index
    %c0_322 = arith.constant 0 : index
    %c0_323 = arith.constant 0 : index
    %652 = vector.load %arg2[%651, %c0_322, %c0_323] : memref<6x1x32xf32, #tpu.memory_space<vmem>>, vector<1x1x32xf32>
    %653 = vector.shape_cast %652 : vector<1x1x32xf32> to vector<1x32xf32>
    %c3_324 = arith.constant 3 : index
    %c0_325 = arith.constant 0 : index
    %654 = vector.load %arg6[%c3_324, %c0_325] : memref<8x32xf32, #tpu.memory_space<vmem>>, vector<1x32xf32>
    tpu.vector_store %arg6[%c3_324, %c0_325], %653 {strides = array<i32>} : memref<8x32xf32, #tpu.memory_space<vmem>>, vector<1x32xf32>,
    %c32_i32_326 = arith.constant 32 : i32
    %655 = arith.addi %0, %c32_i32_326 : i32
    %656 = arith.addi %655, %c7_i32 : i32
    %657 = arith.index_cast %656 : i32 to index
    %658 = memref.load %arg1[%657] : memref<64xi32, #tpu.memory_space<smem>>
    %659 = arith.index_cast %658 : i32 to index
    %c0_327 = arith.constant 0 : index
    %c0_328 = arith.constant 0 : index
    %660 = vector.load %arg2[%659, %c0_327, %c0_328] : memref<6x1x32xf32, #tpu.memory_space<vmem>>, vector<1x1x32xf32>
    %661 = vector.shape_cast %660 : vector<1x1x32xf32> to vector<1x32xf32>
    %c4_329 = arith.constant 4 : index
    %c0_330 = arith.constant 0 : index
    %662 = vector.load %arg6[%c4_329, %c0_330] : memref<8x32xf32, #tpu.memory_space<vmem>>, vector<1x32xf32>
    tpu.vector_store %arg6[%c4_329, %c0_330], %661 {strides = array<i32>} : memref<8x32xf32, #tpu.memory_space<vmem>>, vector<1x32xf32>,
    %c40_i32_331 = arith.constant 40 : i32
    %663 = arith.addi %0, %c40_i32_331 : i32
    %664 = arith.addi %663, %c7_i32 : i32
    %665 = arith.index_cast %664 : i32 to index
    %666 = memref.load %arg1[%665] : memref<64xi32, #tpu.memory_space<smem>>
    %667 = arith.index_cast %666 : i32 to index
    %c0_332 = arith.constant 0 : index
    %c0_333 = arith.constant 0 : index
    %668 = vector.load %arg2[%667, %c0_332, %c0_333] : memref<6x1x32xf32, #tpu.memory_space<vmem>>, vector<1x1x32xf32>
    %669 = vector.shape_cast %668 : vector<1x1x32xf32> to vector<1x32xf32>
    %c5_334 = arith.constant 5 : index
    %c0_335 = arith.constant 0 : index
    %670 = vector.load %arg6[%c5_334, %c0_335] : memref<8x32xf32, #tpu.memory_space<vmem>>, vector<1x32xf32>
    tpu.vector_store %arg6[%c5_334, %c0_335], %669 {strides = array<i32>} : memref<8x32xf32, #tpu.memory_space<vmem>>, vector<1x32xf32>,
    %c48_i32_336 = arith.constant 48 : i32
    %671 = arith.addi %0, %c48_i32_336 : i32
    %672 = arith.addi %671, %c7_i32 : i32
    %673 = arith.index_cast %672 : i32 to index
    %674 = memref.load %arg1[%673] : memref<64xi32, #tpu.memory_space<smem>>
    %675 = arith.index_cast %674 : i32 to index
    %c0_337 = arith.constant 0 : index
    %c0_338 = arith.constant 0 : index
    %676 = vector.load %arg2[%675, %c0_337, %c0_338] : memref<6x1x32xf32, #tpu.memory_space<vmem>>, vector<1x1x32xf32>
    %677 = vector.shape_cast %676 : vector<1x1x32xf32> to vector<1x32xf32>
    %c6_339 = arith.constant 6 : index
    %c0_340 = arith.constant 0 : index
    %678 = vector.load %arg6[%c6_339, %c0_340] : memref<8x32xf32, #tpu.memory_space<vmem>>, vector<1x32xf32>
    tpu.vector_store %arg6[%c6_339, %c0_340], %677 {strides = array<i32>} : memref<8x32xf32, #tpu.memory_space<vmem>>, vector<1x32xf32>,
    %c56_i32_341 = arith.constant 56 : i32
    %679 = arith.addi %0, %c56_i32_341 : i32
    %680 = arith.addi %679, %c7_i32 : i32
    %681 = arith.index_cast %680 : i32 to index
    %682 = memref.load %arg1[%681] : memref<64xi32, #tpu.memory_space<smem>>
    %683 = arith.index_cast %682 : i32 to index
    %c0_342 = arith.constant 0 : index
    %c0_343 = arith.constant 0 : index
    %684 = vector.load %arg2[%683, %c0_342, %c0_343] : memref<6x1x32xf32, #tpu.memory_space<vmem>>, vector<1x1x32xf32>
    %685 = vector.shape_cast %684 : vector<1x1x32xf32> to vector<1x32xf32>
    %c7_344 = arith.constant 7 : index
    %c0_345 = arith.constant 0 : index
    %686 = vector.load %arg6[%c7_344, %c0_345] : memref<8x32xf32, #tpu.memory_space<vmem>>, vector<1x32xf32>
    tpu.vector_store %arg6[%c7_344, %c0_345], %685 {strides = array<i32>} : memref<8x32xf32, #tpu.memory_space<vmem>>, vector<1x32xf32>,
    %c0_346 = arith.constant 0 : index
    %c0_347 = arith.constant 0 : index
    %687 = vector.load %arg6[%c0_346, %c0_347] : memref<8x32xf32, #tpu.memory_space<vmem>>, vector<8x32xf32>
    %688 = arith.index_cast %c7_i32 : i32 to index
    %c0_348 = arith.constant 0 : index
    %c0_349 = arith.constant 0 : index
    %689 = vector.load %arg3[%688, %c0_348, %c0_349] : memref<8x1x32xf32, #tpu.memory_space<vmem>>, vector<1x1x32xf32>
    %690 = vector.shape_cast %689 : vector<1x1x32xf32> to vector<1x32xf32>
    %691 = vector.broadcast %690 : vector<1x32xf32> to vector<8x32xf32>
    %692 = arith.addf %687, %691 : vector<8x32xf32>
    %693 = vector.broadcast %1 : vector<1x32xf32> to vector<8x32xf32>
    %694 = arith.mulf %692, %693 : vector<8x32xf32>
    %cst_350 = arith.constant dense<0.000000e+00> : vector<8xf32>
    %695 = vector.multi_reduction <add>, %694, %cst_350 [1] : vector<8x32xf32> to vector<8xf32>
    %696 = vector.shape_cast %695 : vector<8xf32> to vector<8x1xf32>
    %697 = arith.maximumf %609, %696 : vector<8x1xf32>
    %698 = arith.subf %609, %697 : vector<8x1xf32>
    %699 = math.exp %698 : vector<8x1xf32>
    %700 = arith.subf %696, %697 : vector<8x1xf32>
    %701 = math.exp %700 : vector<8x1xf32>
    %702 = arith.mulf %699, %615 : vector<8x1xf32>
    %703 = arith.addf %702, %701 : vector<8x1xf32>
    %704 = vector.broadcast %699 : vector<8x1xf32> to vector<8x32xf32>
    %705 = arith.mulf %704, %620 : vector<8x32xf32>
    %706 = vector.broadcast %701 : vector<8x1xf32> to vector<8x32xf32>
    %707 = arith.mulf %706, %692 : vector<8x32xf32>
    %708 = arith.addf %705, %707 : vector<8x32xf32>
    %709 = arith.addf %621, %692 : vector<8x32xf32>
    %710 = arith.maximumf %622, %692 : vector<8x32xf32>
    %c8_i32_351 = arith.constant 8 : i32
    %711 = tpu.reciprocal %703 : vector<8x1xf32> -> vector<8x1xf32>
    %712 = vector.broadcast %711 : vector<8x1xf32> to vector<8x32xf32>
    %713 = arith.mulf %708, %712 : vector<8x32xf32>
    %cst_352 = arith.constant 1.250000e-01 : f32
    %714 = vector.broadcast %cst_352 : f32 to vector<8x32xf32>
    %715 = arith.mulf %709, %714 : vector<8x32xf32>
    %cst_353 = arith.constant 0.000000e+00 : f32
    %716 = vector.broadcast %cst_353 : f32 to vector<8x32xf32>
    %717 = tpu.concatenate %713, %715, %710, %716 in 1 : vector<8x32xf32>, vector<8x32xf32>, vector<8x32xf32>, vector<8x32xf32> -> vector<8x128xf32>
    %c0_354 = arith.constant 0 : index
    %c0_355 = arith.constant 0 : index
    %718 = vector.load %arg5[%c0_354, %c0_355] : memref<8x128xf32, #tpu.memory_space<vmem>>, vector<8x128xf32>
    tpu.vector_store %arg5[%c0_354, %c0_355], %717 {strides = array<i32>} : memref<8x128xf32, #tpu.memory_space<vmem>>, vector<8x128xf32>,
    return
  }
  func.func @transform_0(%arg0: i32, %arg1: memref<64xi32, #tpu.memory_space<smem>>) -> (i32, i32, i32) {
    %c0_i32 = arith.constant 0 : i32
    %c0_i32_0 = arith.constant 0 : i32
    %c0_i32_1 = arith.constant 0 : i32
    %c0_i32_2 = arith.constant 0 : i32
    return %c0_i32, %c0_i32_0, %c0_i32_1 : i32, i32, i32
  }
  func.func @transform_1(%arg0: i32, %arg1: memref<64xi32, #tpu.memory_space<smem>>) -> (i32, i32, i32) {
    %c0_i32 = arith.constant 0 : i32
    %c0_i32_0 = arith.constant 0 : i32
    %c0_i32_1 = arith.constant 0 : i32
    %c0_i32_2 = arith.constant 0 : i32
    return %c0_i32, %c0_i32_0, %c0_i32_1 : i32, i32, i32
  }
  func.func @transform_2(%arg0: i32, %arg1: memref<64xi32, #tpu.memory_space<smem>>) -> (i32, i32) {
    %c0_i32 = arith.constant 0 : i32
    %c0_i32_0 = arith.constant 0 : i32
    %c0_i32_1 = arith.constant 0 : i32
    return %c0_i32, %c0_i32_0 : i32, i32
  }
  func.func @transform_3(%arg0: i32, %arg1: memref<64xi32, #tpu.memory_space<smem>>) -> (i32, i32) {
    %c0_i32 = arith.constant 0 : i32
    %c0_i32_0 = arith.constant 0 : i32
    return %arg0, %c0_i32 : i32, i32
  }
}

</mosaic_0001>

<llo_original>
// kernel: tpu_custom_call.1
$region0: #{tpu_custom_call.1}
  #allocation0 [shape = 'u32[]', space=smem, size = 0x4, offset = 0x4, fixed_abs, tag = 'smem constant byte address 0x4 - core index']
  #allocation1 [shape = 'u32[144,128]{1,0:T(1,128)}', space=vmem, size = 0x12000, scoped, tag = 'internal scratch']
  #allocation2 [shape = 'f32[8,32]{1,0:T(8,128)}', space=vmem, size = 0x1000, scoped, tag = 'scratch operand']
  #allocation3 [shape = 's32[1]{0}', space=sflag, size = 0x4, scoped, tag = 'scoped memory for tpu_custom_call.1']
  #allocation4 [shape = 'u8[512]{0}', space=smem, size = 0x200, scoped, tag = 'prefetched SMEM operand 0']
  %s0 = inlined_call_operand.hbm [shape: s32[64], index: 0, kind: input, shape index: {}]
  %s1 = inlined_call_operand.hbm [shape: f32[6,1,32], index: 1, kind: input, shape index: {}]
  %s2 = inlined_call_operand.hbm [shape: f32[8,1,32], index: 2, kind: input, shape index: {}]
  %s3 = inlined_call_operand.vmem [shape: f32[1,32], index: 3, kind: input, shape index: {}]
  %s4 = inlined_call_operand.hbm [shape: f32[8,128], index: 4, kind: output, shape index: {}]
  %s5 = sld [smem:[#allocation0]]
  $region30: #{tpu_custom_call.1} parent=0
    _
  %s7 = ssub.s32 1, %s5
  %s8 = scalar_select 0, %s7, %s5
  %10 = dma.hbm_to_smem %s0, 16, [#allocation4], [#allocation3]
  %11 = dma.done [#allocation3], 16
  %12 = sfence
  $region1: #{tpu_custom_call.1} parent=0
    #allocation5 [shape = 'u8[3072]{0}', space=vmem, size = 0xc00, scoped, tag = 'input window, operand 1, single buffered']
    #allocation6 [shape = 's32[1]{0}', space=sflag, size = 0x4, scoped, tag = 'scoped memory for tpu_custom_call.1']
    #allocation7 [shape = 's32[1]{0}', space=sflag, size = 0x4, scoped, tag = 'scoped memory for tpu_custom_call.1']
    #allocation8 [shape = 'u8[4096]{0}', space=vmem, size = 0x1000, scoped, tag = 'input window, operand 2, single buffered']
    #allocation9 [shape = 's32[1]{0}', space=sflag, size = 0x4, scoped, tag = 'scoped memory for tpu_custom_call.1']
    #allocation10 [shape = 'u8[4096]{0}', space=vmem, size = 0x1000, scoped, tag = 'output window, operand 0, single buffered']
    %13 = vsyncpa [#allocation6], 0
    %14 = vsyncpa [#allocation9], 0
    %15 = vsyncpa [#allocation7], 0
    // Predicated region
    $region2: #{tpu_custom_call.1} parent=1 // pred_check
      _
    $region3: #{tpu_custom_call.1} parent=1 // pred_check_branch
      %17 = sbr.rel (0) target = $region5
    $region4: #{tpu_custom_call.1} parent=1 // pred_region
      %s19 = ssub.s32 96, 96
      %20 = vsyncadd [#allocation6], %s19
      %s21 = sshll.u32 [#allocation5], 4
      %s22 = int_to_ptr.vmem [resolvable:$true] %s21
      %27 = dma.hbm_to_vmem [thread:$0]  %s1, 96, %s22, [#allocation6], 16, 16, 1
    $region5: #{tpu_custom_call.1} parent=1 // pred_fallthru
      _
    // Predicated region
    $region6: #{tpu_custom_call.1} parent=1 // pred_check
      _
    $region7: #{tpu_custom_call.1} parent=1 // pred_check_branch
      %29 = sbr.rel (0) target = $region9
    $region8: #{tpu_custom_call.1} parent=1 // pred_region
      %s31 = ssub.s32 128, 128
      %32 = vsyncadd [#allocation9], %s31
      %s33 = sshll.u32 [#allocation8], 4
      %s34 = int_to_ptr.vmem [resolvable:$true] %s33
      %39 = dma.hbm_to_vmem [thread:$0]  %s2, 128, %s34, [#allocation9], 16, 16, 1
    $region9: #{tpu_custom_call.1} parent=1 // pred_fallthru
      _
    // Predicated region
    $region10: #{tpu_custom_call.1} parent=1 // pred_check
      _
    $region11: #{tpu_custom_call.1} parent=1 // pred_check_branch
      %41 = sbr.rel (0) target = $region13
    $region12: #{tpu_custom_call.1} parent=1 // pred_region
      _
    $region13: #{tpu_custom_call.1} parent=1 // pred_fallthru
      _
    // Predicated region
    $region14: #{tpu_custom_call.1} parent=1 // pred_check
      _
    $region15: #{tpu_custom_call.1} parent=1 // pred_check_branch
      %43 = sbr.rel (0) target = $region17
    $region16: #{tpu_custom_call.1} parent=1 // pred_region
      %44 = dma.done [#allocation6], 96
    $region17: #{tpu_custom_call.1} parent=1 // pred_fallthru
      _
    // Predicated region
    $region18: #{tpu_custom_call.1} parent=1 // pred_check
      _
    $region19: #{tpu_custom_call.1} parent=1 // pred_check_branch
      %46 = sbr.rel (0) target = $region21
    $region20: #{tpu_custom_call.1} parent=1 // pred_region
      %47 = dma.done [#allocation9], 128
    $region21: #{tpu_custom_call.1} parent=1 // pred_fallthru
      _
    %s48 = smul.u32 0, 64
    %v49 = vld [vmem:[%s3] sm:$0x1]
    %s50 = sld [smem:[#allocation4 + %s48]]
    %s51 = scalar_lea.vmem [#allocation5], %s50
    %v52 = vld [vmem:[%s51] sm:$0x1]
    %vm53 = vcmask 253952
    %54 = vst.msk [vmem:[#allocation2] sm:$0x1] %vm53, %v52
    %s55 = sadd.s32 %s48, 8
    %s56 = sld [smem:[#allocation4 + %s55]]
    %s57 = scalar_lea.vmem [#allocation5], %s56
    %v58 = vld [vmem:[%s57] sm:$0x1]
    %59 = vst.msk [vmem:[#allocation2 + $0x1] sm:$0x1] %vm53, %v58
    %s60 = sadd.s32 %s48, 16
    %s61 = sld [smem:[#allocation4 + %s60]]
    %s62 = scalar_lea.vmem [#allocation5], %s61
    %v63 = vld [vmem:[%s62] sm:$0x1]
    %64 = vst.msk [vmem:[#allocation2 + $0x2] sm:$0x1] %vm53, %v63
    %s65 = sadd.s32 %s48, 24
    %s66 = sld [smem:[#allocation4 + %s65]]
    %s67 = scalar_lea.vmem [#allocation5], %s66
    %v68 = vld [vmem:[%s67] sm:$0x1]
    %69 = vst.msk [vmem:[#allocation2 + $0x3] sm:$0x1] %vm53, %v68
    %s70 = sadd.s32 %s48, 32
    %s71 = sld [smem:[#allocation4 + %s70]]
    %s72 = scalar_lea.vmem [#allocation5], %s71
    %v73 = vld [vmem:[%s72] sm:$0x1]
    %74 = vst.msk [vmem:[#allocation2 + $0x4] sm:$0x1] %vm53, %v73
    %s75 = sadd.s32 %s48, 40
    %s76 = sld [smem:[#allocation4 + %s75]]
    %s77 = scalar_lea.vmem [#allocation5], %s76
    %v78 = vld [vmem:[%s77] sm:$0x1]
    %79 = vst.msk [vmem:[#allocation2 + $0x5] sm:$0x1] %vm53, %v78
    %s80 = sadd.s32 %s48, 48
    %s81 = sld [smem:[#allocation4 + %s80]]
    %s82 = scalar_lea.vmem [#allocation5], %s81
    %v83 = vld [vmem:[%s82] sm:$0x1]
    %84 = vst.msk [vmem:[#allocation2 + $0x6] sm:$0x1] %vm53, %v83
    %s85 = sadd.s32 %s48, 56
    %s86 = sld [smem:[#allocation4 + %s85]]
    %s87 = scalar_lea.vmem [#allocation5], %s86
    %v88 = vld [vmem:[%s87] sm:$0x1]
    %89 = vst.msk [vmem:[#allocation2 + $0x7] sm:$0x1] %vm53, %v88
    %v90 = vld [vmem:[#allocation2] sm:$0xff]
    %v91 = vld [vmem:[#allocation8] sm:$0x1]
    %v93 = vlaneseq
    %v94 = vshrl.u32 %v93, 7
    %v95 = vsub.s32 0, %v94
    %v96 = vrot.slane %v91, %v95
    %v98 = vadd.f32 %v90, %v96
    %v100 = vlaneseq
    %v101 = vshrl.u32 %v100, 7
    %v102 = vsub.s32 0, %v101
    %v103 = vrot.slane %v49, %v102
    %v105 = vmul.f32 %v98, %v103
    %vm106 = vcmask 261120
    %v107 = vsel %vm106, %v105, 0.0
    %108 = vadd.xlane.f32.xlu0 %v107
    %v109 = vpop.xlane.xlu0 %108
    %v110 = vsub.f32 -inf, %v109
    %v111 = vmul.f32 %v110, 1.442695
    %v112 = vpow.pop %v111
    %v113 = vsub.f32 %v109, %v109
    %v114 = vmul.f32 %v113, 1.442695
    %v115 = vpow.pop %v114
    %v116 = vmul.f32 %v112, 0.0
    %v117 = vadd.f32 %v116, %v115
    %v118 = vmul.f32 %v115, %v98
    %v119 = vadd.f32 %v116, %v118
    %v120 = vadd.f32 %v98, 0.0
    %s121 = sadd.s32 %s48, 1
    %s122 = sld [smem:[#allocation4 + %s121]]
    %s123 = scalar_lea.vmem [#allocation5], %s122
    %v124 = vld [vmem:[%s123] sm:$0x1]
    %125 = vst.msk [vmem:[#allocation2] sm:$0x1] %vm53, %v124
    %s126 = sadd.s32 %s48, 9
    %s127 = sld [smem:[#allocation4 + %s126]]
    %s128 = scalar_lea.vmem [#allocation5], %s127
    %v129 = vld [vmem:[%s128] sm:$0x1]
    %130 = vst.msk [vmem:[#allocation2 + $0x1] sm:$0x1] %vm53, %v129
    %s131 = sadd.s32 %s48, 17
    %s132 = sld [smem:[#allocation4 + %s131]]
    %s133 = scalar_lea.vmem [#allocation5], %s132
    %v134 = vld [vmem:[%s133] sm:$0x1]
    %135 = vst.msk [vmem:[#allocation2 + $0x2] sm:$0x1] %vm53, %v134
    %s136 = sadd.s32 %s48, 25
    %s137 = sld [smem:[#allocation4 + %s136]]
    %s138 = scalar_lea.vmem [#allocation5], %s137
    %v139 = vld [vmem:[%s138] sm:$0x1]
    %140 = vst.msk [vmem:[#allocation2 + $0x3] sm:$0x1] %vm53, %v139
    %s141 = sadd.s32 %s48, 33
    %s142 = sld [smem:[#allocation4 + %s141]]
    %s143 = scalar_lea.vmem [#allocation5], %s142
    %v144 = vld [vmem:[%s143] sm:$0x1]
    %145 = vst.msk [vmem:[#allocation2 + $0x4] sm:$0x1] %vm53, %v144
    %s146 = sadd.s32 %s48, 41
    %s147 = sld [smem:[#allocation4 + %s146]]
    %s148 = scalar_lea.vmem [#allocation5], %s147
    %v149 = vld [vmem:[%s148] sm:$0x1]
    %150 = vst.msk [vmem:[#allocation2 + $0x5] sm:$0x1] %vm53, %v149
    %s151 = sadd.s32 %s48, 49
    %s152 = sld [smem:[#allocation4 + %s151]]
    %s153 = scalar_lea.vmem [#allocation5], %s152
    %v154 = vld [vmem:[%s153] sm:$0x1]
    %155 = vst.msk [vmem:[#allocation2 + $0x6] sm:$0x1] %vm53, %v154
    %s156 = sadd.s32 %s48, 57
    %s157 = sld [smem:[#allocation4 + %s156]]
    %s158 = scalar_lea.vmem [#allocation5], %s157
    %v159 = vld [vmem:[%s158] sm:$0x1]
    %160 = vst.msk [vmem:[#allocation2 + $0x7] sm:$0x1] %vm53, %v159
    %v161 = vld [vmem:[#allocation2] sm:$0xff]
    %s162 = scalar_lea.vmem [#allocation8], 1
    %v163 = vld [vmem:[%s162] sm:$0x1]
    %v165 = vlaneseq
    %v166 = vshrl.u32 %v165, 7
    %v167 = vsub.s32 0, %v166
    %v168 = vrot.slane %v163, %v167
    %v170 = vadd.f32 %v161, %v168
    %v171 = vmul.f32 %v170, %v103
    %v172 = vsel %vm106, %v171, 0.0
    %173 = vadd.xlane.f32.xlu0 %v172
    %v174 = vpop.xlane.xlu0 %173
    %v175 = vmax.f32 %v109, %v174
    %v176 = vsub.f32 %v109, %v175
    %v177 = vmul.f32 %v176, 1.442695
    %v178 = vpow.pop %v177
    %v179 = vsub.f32 %v174, %v175
    %v180 = vmul.f32 %v179, 1.442695
    %v181 = vpow.pop %v180
    %v182 = vmul.f32 %v178, %v117
    %v183 = vadd.f32 %v182, %v181
    %v184 = vmul.f32 %v178, %v119
    %v185 = vmul.f32 %v181, %v170
    %v186 = vadd.f32 %v184, %v185
    %v187 = vadd.f32 %v120, %v170
    %v188 = vmax.f32 %v98, %v170
    %s189 = sadd.s32 %s48, 2
    %s190 = sld [smem:[#allocation4 + %s189]]
    %s191 = scalar_lea.vmem [#allocation5], %s190
    %v192 = vld [vmem:[%s191] sm:$0x1]
    %193 = vst.msk [vmem:[#allocation2] sm:$0x1] %vm53, %v192
    %s194 = sadd.s32 %s48, 10
    %s195 = sld [smem:[#allocation4 + %s194]]
    %s196 = scalar_lea.vmem [#allocation5], %s195
    %v197 = vld [vmem:[%s196] sm:$0x1]
    %198 = vst.msk [vmem:[#allocation2 + $0x1] sm:$0x1] %vm53, %v197
    %s199 = sadd.s32 %s48, 18
    %s200 = sld [smem:[#allocation4 + %s199]]
    %s201 = scalar_lea.vmem [#allocation5], %s200
    %v202 = vld [vmem:[%s201] sm:$0x1]
    %203 = vst.msk [vmem:[#allocation2 + $0x2] sm:$0x1] %vm53, %v202
    %s204 = sadd.s32 %s48, 26
    %s205 = sld [smem:[#allocation4 + %s204]]
    %s206 = scalar_lea.vmem [#allocation5], %s205
    %v207 = vld [vmem:[%s206] sm:$0x1]
    %208 = vst.msk [vmem:[#allocation2 + $0x3] sm:$0x1] %vm53, %v207
    %s209 = sadd.s32 %s48, 34
    %s210 = sld [smem:[#allocation4 + %s209]]
    %s211 = scalar_lea.vmem [#allocation5], %s210
    %v212 = vld [vmem:[%s211] sm:$0x1]
    %213 = vst.msk [vmem:[#allocation2 + $0x4] sm:$0x1] %vm53, %v212
    %s214 = sadd.s32 %s48, 42
    %s215 = sld [smem:[#allocation4 + %s214]]
    %s216 = scalar_lea.vmem [#allocation5], %s215
    %v217 = vld [vmem:[%s216] sm:$0x1]
    %218 = vst.msk [vmem:[#allocation2 + $0x5] sm:$0x1] %vm53, %v217
    %s219 = sadd.s32 %s48, 50
    %s220 = sld [smem:[#allocation4 + %s219]]
    %s221 = scalar_lea.vmem [#allocation5], %s220
    %v222 = vld [vmem:[%s221] sm:$0x1]
    %223 = vst.msk [vmem:[#allocation2 + $0x6] sm:$0x1] %vm53, %v222
    %s224 = sadd.s32 %s48, 58
    %s225 = sld [smem:[#allocation4 + %s224]]
    %s226 = scalar_lea.vmem [#allocation5], %s225
    %v227 = vld [vmem:[%s226] sm:$0x1]
    %228 = vst.msk [vmem:[#allocation2 + $0x7] sm:$0x1] %vm53, %v227
    %v229 = vld [vmem:[#allocation2] sm:$0xff]
    %s230 = scalar_lea.vmem [#allocation8], 2
    %v231 = vld [vmem:[%s230] sm:$0x1]
    %v233 = vlaneseq
    %v234 = vshrl.u32 %v233, 7
    %v235 = vsub.s32 0, %v234
    %v236 = vrot.slane %v231, %v235
    %v238 = vadd.f32 %v229, %v236
    %v239 = vmul.f32 %v238, %v103
    %v240 = vsel %vm106, %v239, 0.0
    %241 = vadd.xlane.f32.xlu0 %v240
    %v242 = vpop.xlane.xlu0 %241
    %v243 = vmax.f32 %v175, %v242
    %v244 = vsub.f32 %v175, %v243
    %v245 = vmul.f32 %v244, 1.442695
    %v246 = vpow.pop %v245
    %v247 = vsub.f32 %v242, %v243
    %v248 = vmul.f32 %v247, 1.442695
    %v249 = vpow.pop %v248
    %v250 = vmul.f32 %v246, %v183
    %v251 = vadd.f32 %v250, %v249
    %v252 = vmul.f32 %v246, %v186
    %v253 = vmul.f32 %v249, %v238
    %v254 = vadd.f32 %v252, %v253
    %v255 = vadd.f32 %v187, %v238
    %v256 = vmax.f32 %v188, %v238
    %s257 = sadd.s32 %s48, 3
    %s258 = sld [smem:[#allocation4 + %s257]]
    %s259 = scalar_lea.vmem [#allocation5], %s258
    %v260 = vld [vmem:[%s259] sm:$0x1]
    %261 = vst.msk [vmem:[#allocation2] sm:$0x1] %vm53, %v260
    %s262 = sadd.s32 %s48, 11
    %s263 = sld [smem:[#allocation4 + %s262]]
    %s264 = scalar_lea.vmem [#allocation5], %s263
    %v265 = vld [vmem:[%s264] sm:$0x1]
    %266 = vst.msk [vmem:[#allocation2 + $0x1] sm:$0x1] %vm53, %v265
    %s267 = sadd.s32 %s48, 19
    %s268 = sld [smem:[#allocation4 + %s267]]
    %s269 = scalar_lea.vmem [#allocation5], %s268
    %v270 = vld [vmem:[%s269] sm:$0x1]
    %271 = vst.msk [vmem:[#allocation2 + $0x2] sm:$0x1] %vm53, %v270
    %s272 = sadd.s32 %s48, 27
    %s273 = sld [smem:[#allocation4 + %s272]]
    %s274 = scalar_lea.vmem [#allocation5], %s273
    %v275 = vld [vmem:[%s274] sm:$0x1]
    %276 = vst.msk [vmem:[#allocation2 + $0x3] sm:$0x1] %vm53, %v275
    %s277 = sadd.s32 %s48, 35
    %s278 = sld [smem:[#allocation4 + %s277]]
    %s279 = scalar_lea.vmem [#allocation5], %s278
    %v280 = vld [vmem:[%s279] sm:$0x1]
    %281 = vst.msk [vmem:[#allocation2 + $0x4] sm:$0x1] %vm53, %v280
    %s282 = sadd.s32 %s48, 43
    %s283 = sld [smem:[#allocation4 + %s282]]
    %s284 = scalar_lea.vmem [#allocation5], %s283
    %v285 = vld [vmem:[%s284] sm:$0x1]
    %286 = vst.msk [vmem:[#allocation2 + $0x5] sm:$0x1] %vm53, %v285
    %s287 = sadd.s32 %s48, 51
    %s288 = sld [smem:[#allocation4 + %s287]]
    %s289 = scalar_lea.vmem [#allocation5], %s288
    %v290 = vld [vmem:[%s289] sm:$0x1]
    %291 = vst.msk [vmem:[#allocation2 + $0x6] sm:$0x1] %vm53, %v290
    %s292 = sadd.s32 %s48, 59
    %s293 = sld [smem:[#allocation4 + %s292]]
    %s294 = scalar_lea.vmem [#allocation5], %s293
    %v295 = vld [vmem:[%s294] sm:$0x1]
    %296 = vst.msk [vmem:[#allocation2 + $0x7] sm:$0x1] %vm53, %v295
    %v297 = vld [vmem:[#allocation2] sm:$0xff]
    %s298 = scalar_lea.vmem [#allocation8], 3
    %v299 = vld [vmem:[%s298] sm:$0x1]
    %v301 = vlaneseq
    %v302 = vshrl.u32 %v301, 7
    %v303 = vsub.s32 0, %v302
    %v304 = vrot.slane %v299, %v303
    %v306 = vadd.f32 %v297, %v304
    %v307 = vmul.f32 %v306, %v103
    %v308 = vsel %vm106, %v307, 0.0
    %309 = vadd.xlane.f32.xlu0 %v308
    %v310 = vpop.xlane.xlu0 %309
    %v311 = vmax.f32 %v243, %v310
    %v312 = vsub.f32 %v243, %v311
    %v313 = vmul.f32 %v312, 1.442695
    %v314 = vpow.pop %v313
    %v315 = vsub.f32 %v310, %v311
    %v316 = vmul.f32 %v315, 1.442695
    %v317 = vpow.pop %v316
    %v318 = vmul.f32 %v314, %v251
    %v319 = vadd.f32 %v318, %v317
    %v320 = vmul.f32 %v314, %v254
    %v321 = vmul.f32 %v317, %v306
    %v322 = vadd.f32 %v320, %v321
    %v323 = vadd.f32 %v255, %v306
    %v324 = vmax.f32 %v256, %v306
    %s325 = sadd.s32 %s48, 4
    %s326 = sld [smem:[#allocation4 + %s325]]
    %s327 = scalar_lea.vmem [#allocation5], %s326
    %v328 = vld [vmem:[%s327] sm:$0x1]
    %329 = vst.msk [vmem:[#allocation2] sm:$0x1] %vm53, %v328
    %s330 = sadd.s32 %s48, 12
    %s331 = sld [smem:[#allocation4 + %s330]]
    %s332 = scalar_lea.vmem [#allocation5], %s331
    %v333 = vld [vmem:[%s332] sm:$0x1]
    %334 = vst.msk [vmem:[#allocation2 + $0x1] sm:$0x1] %vm53, %v333
    %s335 = sadd.s32 %s48, 20
    %s336 = sld [smem:[#allocation4 + %s335]]
    %s337 = scalar_lea.vmem [#allocation5], %s336
    %v338 = vld [vmem:[%s337] sm:$0x1]
    %339 = vst.msk [vmem:[#allocation2 + $0x2] sm:$0x1] %vm53, %v338
    %s340 = sadd.s32 %s48, 28
    %s341 = sld [smem:[#allocation4 + %s340]]
    %s342 = scalar_lea.vmem [#allocation5], %s341
    %v343 = vld [vmem:[%s342] sm:$0x1]
    %344 = vst.msk [vmem:[#allocation2 + $0x3] sm:$0x1] %vm53, %v343
    %s345 = sadd.s32 %s48, 36
    %s346 = sld [smem:[#allocation4 + %s345]]
    %s347 = scalar_lea.vmem [#allocation5], %s346
    %v348 = vld [vmem:[%s347] sm:$0x1]
    %349 = vst.msk [vmem:[#allocation2 + $0x4] sm:$0x1] %vm53, %v348
    %s350 = sadd.s32 %s48, 44
    %s351 = sld [smem:[#allocation4 + %s350]]
    %s352 = scalar_lea.vmem [#allocation5], %s351
    %v353 = vld [vmem:[%s352] sm:$0x1]
    %354 = vst.msk [vmem:[#allocation2 + $0x5] sm:$0x1] %vm53, %v353
    %s355 = sadd.s32 %s48, 52
    %s356 = sld [smem:[#allocation4 + %s355]]
    %s357 = scalar_lea.vmem [#allocation5], %s356
    %v358 = vld [vmem:[%s357] sm:$0x1]
    %359 = vst.msk [vmem:[#allocation2 + $0x6] sm:$0x1] %vm53, %v358
    %s360 = sadd.s32 %s48, 60
    %s361 = sld [smem:[#allocation4 + %s360]]
    %s362 = scalar_lea.vmem [#allocation5], %s361
    %v363 = vld [vmem:[%s362] sm:$0x1]
    %364 = vst.msk [vmem:[#allocation2 + $0x7] sm:$0x1] %vm53, %v363
    %v365 = vld [vmem:[#allocation2] sm:$0xff]
    %s366 = scalar_lea.vmem [#allocation8], 4
    %v367 = vld [vmem:[%s366] sm:$0x1]
    %v369 = vlaneseq
    %v370 = vshrl.u32 %v369, 7
    %v371 = vsub.s32 0, %v370
    %v372 = vrot.slane %v367, %v371
    %v374 = vadd.f32 %v365, %v372
    %v375 = vmul.f32 %v374, %v103
    %v376 = vsel %vm106, %v375, 0.0
    %377 = vadd.xlane.f32.xlu0 %v376
    %v378 = vpop.xlane.xlu0 %377
    %v379 = vmax.f32 %v311, %v378
    %v380 = vsub.f32 %v311, %v379
    %v381 = vmul.f32 %v380, 1.442695
    %v382 = vpow.pop %v381
    %v383 = vsub.f32 %v378, %v379
    %v384 = vmul.f32 %v383, 1.442695
    %v385 = vpow.pop %v384
    %v386 = vmul.f32 %v382, %v319
    %v387 = vadd.f32 %v386, %v385
    %v388 = vmul.f32 %v382, %v322
    %v389 = vmul.f32 %v385, %v374
    %v390 = vadd.f32 %v388, %v389
    %v391 = vadd.f32 %v323, %v374
    %v392 = vmax.f32 %v324, %v374
    %s393 = sadd.s32 %s48, 5
    %s394 = sld [smem:[#allocation4 + %s393]]
    %s395 = scalar_lea.vmem [#allocation5], %s394
    %v396 = vld [vmem:[%s395] sm:$0x1]
    %397 = vst.msk [vmem:[#allocation2] sm:$0x1] %vm53, %v396
    %s398 = sadd.s32 %s48, 13
    %s399 = sld [smem:[#allocation4 + %s398]]
    %s400 = scalar_lea.vmem [#allocation5], %s399
    %v401 = vld [vmem:[%s400] sm:$0x1]
    %402 = vst.msk [vmem:[#allocation2 + $0x1] sm:$0x1] %vm53, %v401
    %s403 = sadd.s32 %s48, 21
    %s404 = sld [smem:[#allocation4 + %s403]]
    %s405 = scalar_lea.vmem [#allocation5], %s404
    %v406 = vld [vmem:[%s405] sm:$0x1]
    %407 = vst.msk [vmem:[#allocation2 + $0x2] sm:$0x1] %vm53, %v406
    %s408 = sadd.s32 %s48, 29
    %s409 = sld [smem:[#allocation4 + %s408]]
    %s410 = scalar_lea.vmem [#allocation5], %s409
    %v411 = vld [vmem:[%s410] sm:$0x1]
    %412 = vst.msk [vmem:[#allocation2 + $0x3] sm:$0x1] %vm53, %v411
    %s413 = sadd.s32 %s48, 37
    %s414 = sld [smem:[#allocation4 + %s413]]
    %s415 = scalar_lea.vmem [#allocation5], %s414
    %v416 = vld [vmem:[%s415] sm:$0x1]
    %417 = vst.msk [vmem:[#allocation2 + $0x4] sm:$0x1] %vm53, %v416
    %s418 = sadd.s32 %s48, 45
    %s419 = sld [smem:[#allocation4 + %s418]]
    %s420 = scalar_lea.vmem [#allocation5], %s419
    %v421 = vld [vmem:[%s420] sm:$0x1]
    %422 = vst.msk [vmem:[#allocation2 + $0x5] sm:$0x1] %vm53, %v421
    %s423 = sadd.s32 %s48, 53
    %s424 = sld [smem:[#allocation4 + %s423]]
    %s425 = scalar_lea.vmem [#allocation5], %s424
    %v426 = vld [vmem:[%s425] sm:$0x1]
    %427 = vst.msk [vmem:[#allocation2 + $0x6] sm:$0x1] %vm53, %v426
    %s428 = sadd.s32 %s48, 61
    %s429 = sld [smem:[#allocation4 + %s428]]
    %s430 = scalar_lea.vmem [#allocation5], %s429
    %v431 = vld [vmem:[%s430] sm:$0x1]
    %432 = vst.msk [vmem:[#allocation2 + $0x7] sm:$0x1] %vm53, %v431
    %v433 = vld [vmem:[#allocation2] sm:$0xff]
    %s434 = scalar_lea.vmem [#allocation8], 5
    %v435 = vld [vmem:[%s434] sm:$0x1]
    %v437 = vlaneseq
    %v438 = vshrl.u32 %v437, 7
    %v439 = vsub.s32 0, %v438
    %v440 = vrot.slane %v435, %v439
    %v442 = vadd.f32 %v433, %v440
    %v443 = vmul.f32 %v442, %v103
    %v444 = vsel %vm106, %v443, 0.0
    %445 = vadd.xlane.f32.xlu0 %v444
    %v446 = vpop.xlane.xlu0 %445
    %v447 = vmax.f32 %v379, %v446
    %v448 = vsub.f32 %v379, %v447
    %v449 = vmul.f32 %v448, 1.442695
    %v450 = vpow.pop %v449
    %v451 = vsub.f32 %v446, %v447
    %v452 = vmul.f32 %v451, 1.442695
    %v453 = vpow.pop %v452
    %v454 = vmul.f32 %v450, %v387
    %v455 = vadd.f32 %v454, %v453
    %v456 = vmul.f32 %v450, %v390
    %v457 = vmul.f32 %v453, %v442
    %v458 = vadd.f32 %v456, %v457
    %v459 = vadd.f32 %v391, %v442
    %v460 = vmax.f32 %v392, %v442
    %s461 = sadd.s32 %s48, 6
    %s462 = sld [smem:[#allocation4 + %s461]]
    %s463 = scalar_lea.vmem [#allocation5], %s462
    %v464 = vld [vmem:[%s463] sm:$0x1]
    %465 = vst.msk [vmem:[#allocation2] sm:$0x1] %vm53, %v464
    %s466 = sadd.s32 %s48, 14
    %s467 = sld [smem:[#allocation4 + %s466]]
    %s468 = scalar_lea.vmem [#allocation5], %s467
    %v469 = vld [vmem:[%s468] sm:$0x1]
    %470 = vst.msk [vmem:[#allocation2 + $0x1] sm:$0x1] %vm53, %v469
    %s471 = sadd.s32 %s48, 22
    %s472 = sld [smem:[#allocation4 + %s471]]
    %s473 = scalar_lea.vmem [#allocation5], %s472
    %v474 = vld [vmem:[%s473] sm:$0x1]
    %475 = vst.msk [vmem:[#allocation2 + $0x2] sm:$0x1] %vm53, %v474
    %s476 = sadd.s32 %s48, 30
    %s477 = sld [smem:[#allocation4 + %s476]]
    %s478 = scalar_lea.vmem [#allocation5], %s477
    %v479 = vld [vmem:[%s478] sm:$0x1]
    %480 = vst.msk [vmem:[#allocation2 + $0x3] sm:$0x1] %vm53, %v479
    %s481 = sadd.s32 %s48, 38
    %s482 = sld [smem:[#allocation4 + %s481]]
    %s483 = scalar_lea.vmem [#allocation5], %s482
    %v484 = vld [vmem:[%s483] sm:$0x1]
    %485 = vst.msk [vmem:[#allocation2 + $0x4] sm:$0x1] %vm53, %v484
    %s486 = sadd.s32 %s48, 46
    %s487 = sld [smem:[#allocation4 + %s486]]
    %s488 = scalar_lea.vmem [#allocation5], %s487
    %v489 = vld [vmem:[%s488] sm:$0x1]
    %490 = vst.msk [vmem:[#allocation2 + $0x5] sm:$0x1] %vm53, %v489
    %s491 = sadd.s32 %s48, 54
    %s492 = sld [smem:[#allocation4 + %s491]]
    %s493 = scalar_lea.vmem [#allocation5], %s492
    %v494 = vld [vmem:[%s493] sm:$0x1]
    %495 = vst.msk [vmem:[#allocation2 + $0x6] sm:$0x1] %vm53, %v494
    %s496 = sadd.s32 %s48, 62
    %s497 = sld [smem:[#allocation4 + %s496]]
    %s498 = scalar_lea.vmem [#allocation5], %s497
    %v499 = vld [vmem:[%s498] sm:$0x1]
    %500 = vst.msk [vmem:[#allocation2 + $0x7] sm:$0x1] %vm53, %v499
    %v501 = vld [vmem:[#allocation2] sm:$0xff]
    %s502 = scalar_lea.vmem [#allocation8], 6
    %v503 = vld [vmem:[%s502] sm:$0x1]
    %v505 = vlaneseq
    %v506 = vshrl.u32 %v505, 7
    %v507 = vsub.s32 0, %v506
    %v508 = vrot.slane %v503, %v507
    %v510 = vadd.f32 %v501, %v508
    %v511 = vmul.f32 %v510, %v103
    %v512 = vsel %vm106, %v511, 0.0
    %513 = vadd.xlane.f32.xlu0 %v512
    %v514 = vpop.xlane.xlu0 %513
    %v515 = vmax.f32 %v447, %v514
    %v516 = vsub.f32 %v447, %v515
    %v517 = vmul.f32 %v516, 1.442695
    %v518 = vpow.pop %v517
    %v519 = vsub.f32 %v514, %v515
    %v520 = vmul.f32 %v519, 1.442695
    %v521 = vpow.pop %v520
    %v522 = vmul.f32 %v518, %v455
    %v523 = vadd.f32 %v522, %v521
    %v524 = vmul.f32 %v518, %v458
    %v525 = vmul.f32 %v521, %v510
    %v526 = vadd.f32 %v524, %v525
    %v527 = vadd.f32 %v459, %v510
    %v528 = vmax.f32 %v460, %v510
    %s529 = sadd.s32 %s48, 7
    %s530 = sld [smem:[#allocation4 + %s529]]
    %s531 = scalar_lea.vmem [#allocation5], %s530
    %v532 = vld [vmem:[%s531] sm:$0x1]
    %533 = vst.msk [vmem:[#allocation2] sm:$0x1] %vm53, %v532
    %s534 = sadd.s32 %s48, 15
    %s535 = sld [smem:[#allocation4 + %s534]]
    %s536 = scalar_lea.vmem [#allocation5], %s535
    %v537 = vld [vmem:[%s536] sm:$0x1]
    %538 = vst.msk [vmem:[#allocation2 + $0x1] sm:$0x1] %vm53, %v537
    %s539 = sadd.s32 %s48, 23
    %s540 = sld [smem:[#allocation4 + %s539]]
    %s541 = scalar_lea.vmem [#allocation5], %s540
    %v542 = vld [vmem:[%s541] sm:$0x1]
    %543 = vst.msk [vmem:[#allocation2 + $0x2] sm:$0x1] %vm53, %v542
    %s544 = sadd.s32 %s48, 31
    %s545 = sld [smem:[#allocation4 + %s544]]
    %s546 = scalar_lea.vmem [#allocation5], %s545
    %v547 = vld [vmem:[%s546] sm:$0x1]
    %548 = vst.msk [vmem:[#allocation2 + $0x3] sm:$0x1] %vm53, %v547
    %s549 = sadd.s32 %s48, 39
    %s550 = sld [smem:[#allocation4 + %s549]]
    %s551 = scalar_lea.vmem [#allocation5], %s550
    %v552 = vld [vmem:[%s551] sm:$0x1]
    %553 = vst.msk [vmem:[#allocation2 + $0x4] sm:$0x1] %vm53, %v552
    %s554 = sadd.s32 %s48, 47
    %s555 = sld [smem:[#allocation4 + %s554]]
    %s556 = scalar_lea.vmem [#allocation5], %s555
    %v557 = vld [vmem:[%s556] sm:$0x1]
    %558 = vst.msk [vmem:[#allocation2 + $0x5] sm:$0x1] %vm53, %v557
    %s559 = sadd.s32 %s48, 55
    %s560 = sld [smem:[#allocation4 + %s559]]
    %s561 = scalar_lea.vmem [#allocation5], %s560
    %v562 = vld [vmem:[%s561] sm:$0x1]
    %563 = vst.msk [vmem:[#allocation2 + $0x6] sm:$0x1] %vm53, %v562
    %s564 = sadd.s32 %s48, 63
    %s565 = sld [smem:[#allocation4 + %s564]]
    %s566 = scalar_lea.vmem [#allocation5], %s565
    %v567 = vld [vmem:[%s566] sm:$0x1]
    %568 = vst.msk [vmem:[#allocation2 + $0x7] sm:$0x1] %vm53, %v567
    %v569 = vld [vmem:[#allocation2] sm:$0xff]
    %s570 = scalar_lea.vmem [#allocation8], 7
    %v571 = vld [vmem:[%s570] sm:$0x1]
    %v573 = vlaneseq
    %v574 = vshrl.u32 %v573, 7
    %v575 = vsub.s32 0, %v574
    %v576 = vrot.slane %v571, %v575
    %v578 = vadd.f32 %v569, %v576
    %v579 = vmul.f32 %v578, %v103
    %v580 = vsel %vm106, %v579, 0.0
    %581 = vadd.xlane.f32.xlu0 %v580
    %v582 = vpop.xlane.xlu0 %581
    %v583 = vmax.f32 %v515, %v582
    %v584 = vsub.f32 %v515, %v583
    %v585 = vmul.f32 %v584, 1.442695
    %v586 = vpow.pop %v585
    %v587 = vsub.f32 %v582, %v583
    %v588 = vmul.f32 %v587, 1.442695
    %v589 = vpow.pop %v588
    %v590 = vmul.f32 %v586, %v523
    %v591 = vadd.f32 %v590, %v589
    %v592 = vmul.f32 %v586, %v526
    %v593 = vmul.f32 %v589, %v578
    %v594 = vadd.f32 %v592, %v593
    %v595 = vadd.f32 %v527, %v578
    %v596 = vmax.f32 %v528, %v578
    %v597 = vrcp.pop %v591
    %v598 = vmul.f32 %v594, %v597
    %v599 = vmul.f32 %v595, 0.125
    %601 = vrot.lane.b32.xlu0 %v599, 32
    %v602 = vpop.permute.xlu0 %601
    %605 = vrot.lane.b32.xlu0 %v596, 64
    %v606 = vpop.permute.xlu0 %605
    %v608 = vsel %vm106, %v598, %v602
    %vm609 = vcmask 523264
    %v610 = vsel %vm609, %v608, %v606
    %vm611 = vcmask 785408
    %v612 = vsel %vm611, %v610, 0.0
    %613 = vst [vmem:[#allocation10] sm:$0xff] %v612
    // Predicated region
    $region22: #{tpu_custom_call.1} parent=1 // pred_check
      _
    $region23: #{tpu_custom_call.1} parent=1 // pred_check_branch
      %615 = sbr.rel (0) target = $region25
    $region24: #{tpu_custom_call.1} parent=1 // pred_region
      %s617 = ssub.s32 128, 128
      %618 = vsyncadd [#allocation7], %s617
      %s620 = sshll.u32 [#allocation10], 4
      %s621 = int_to_ptr.vmem [resolvable:$true] %s620
      %623 = dma.vmem_to_hbm [thread:$0]  %s621, 128, %s4, [#allocation7]
    $region25: #{tpu_custom_call.1} parent=1 // pred_fallthru
      _
    // Predicated region
    $region26: #{tpu_custom_call.1} parent=1 // pred_check
      _
    $region27: #{tpu_custom_call.1} parent=1 // pred_check_branch
      %625 = sbr.rel (0) target = $region29
    $region28: #{tpu_custom_call.1} parent=1 // pred_region
      %626 = dma.done [#allocation7], 128
    $region29: #{tpu_custom_call.1} parent=1 // pred_fallthru
      _
    %627 = vsyncpa [#allocation6], 1
    %628 = vsyncpa [#allocation9], 1
    %629 = vsyncpa [#allocation7], 1

</llo_original>
